<compile_context>
chip_gen: v7x
topology: tpu7x:2x2x1
jax: 0.10.0
libtpu: 0.0.40
codegen_flags: <defaults>
</compile_context>

<pallas_src>
import functools

import numpy as np
import jax
import jax.numpy as jnp
from jax import lax
from jax.experimental import pallas as pl
from jax.experimental.pallas import tpu as pltpu

LEAK = 0.01          # nn.LeakyReLU default negative_slope
C_IN = 257           # conv1 input channels
C1 = 32              # conv1 output channels
C2 = 16              # conv2 output channels


def _leaky(v):
    return jnp.where(v >= 0, v, LEAK * v)


# ----------------------------------------------------------------------------- kernel
def make_kernel(H, W):
    P = H * W

    def kernel(
        x_ref,              # [P, Cp]      chunk, channels last, padded 257->384 (bf16)
        masks_ref,          # [P, 9]       f32 tap-validity masks (zero 'SAME' pad)
        w1_ref, b1_ref,     # [Cp, 9*32] bf16, [1, 32] f32     (conv1, tap-major columns)
        w2_ref, b2_ref,     # [32, 9*16] bf16, [1, 16] f32     (conv2, tap-major columns)
        w3_ref, b3_ref,     # [9, 1, 16] f32, [1, 1] f32       (conv3)
        comb_ref,           # [P, 1] f32   per-pixel modulation (FC path, done in wrapper)
        out_ref,            # [P, 1] f32
    ):
        f32, bf16 = jnp.float32, jnp.bfloat16

        masks = masks_ref[...]                                         # [P, 9]
        w3 = w3_ref[...]                                               # [9, 1, 16]

        # ---- conv1 + LeakyReLU: ONE matmul over raw channels, rolls scatter taps ----
        y1 = jnp.dot(x_ref[...], w1_ref[...], preferred_element_type=f32)   # [P, 9*C1]
        h1 = jnp.zeros((P, C1), f32)
        for t in range(9):
            dy, dx = t // 3 - 1, t % 3 - 1
            s = (-(dy * W + dx)) % P
            blk = y1[:, t * C1:(t + 1) * C1]                           # [P, C1]
            if s:
                blk = pltpu.roll(blk, s, 0)                            # sublane roll (XLU)
            h1 = h1 + blk * masks[:, t:t + 1]
        h1 = _leaky(h1 + b1_ref[...])                                  # [P, C1]

        # ---- conv2 + LeakyReLU: same one-matmul + roll-scatter pattern ----
        y2 = jnp.dot(h1.astype(bf16), w2_ref[...],
                     preferred_element_type=f32)                       # [P, 9*C2]
        h2 = jnp.zeros((P, C2), f32)
        for t in range(9):
            dy, dx = t // 3 - 1, t % 3 - 1
            s = (-(dy * W + dx)) % P
            blk = y2[:, t * C2:(t + 1) * C2]                           # [P, C2]
            if s:
                blk = pltpu.roll(blk, s, 0)
            h2 = h2 + blk * masks[:, t:t + 1]
        h2 = _leaky(h2 + b2_ref[...])                                  # [P, C2]

        # ---- per-pixel modulation + LeakyReLU (B == 1 broadcast semantics) ----
        h2m = _leaky(h2 * comb_ref[...])                               # [P, C2]

        # ---- conv3 + sigmoid: one output channel -> VPU + lane reduce, no MXU ----
        acc3 = jnp.zeros((P, C2), f32)
        for t in range(9):
            dy, dx = t // 3 - 1, t % 3 - 1
            s = (-(dy * W + dx)) % P
            blk = pltpu.roll(h2m, s, 0) if s else h2m
            acc3 = acc3 + (blk * masks[:, t:t + 1]) * w3[t]
        pre = jnp.sum(acc3, axis=1, keepdims=True) + b3_ref[...]       # [P, 1]
        out_ref[...] = 1.0 / (1.0 + jnp.exp(-pre))

    return kernel


# ----------------------------------------------------------------------------- one-time prep
def prepare_weights(params, chunk_size):
    """One-time re-layout of weights + masks into kernel-ready arrays.

    Runs ONCE, outside the jitted per-call path (review item #1)."""
    f32, bf16 = jnp.float32, jnp.bfloat16
    H = W = chunk_size
    P = H * W
    Cp = ((C_IN + 127) // 128) * 128                                   # 257 -> 384

    # conv1: [O, C, 3, 3] -> [C, ky, kx, O] -> [C, 9*O], channels padded to Cp.
    w1 = jnp.transpose(params["conv1_w"].astype(f32), (1, 2, 3, 0)).reshape(C_IN, 9 * C1)
    w1 = jnp.pad(w1, ((0, Cp - C_IN), (0, 0))).astype(bf16)            # [Cp, 288]
    b1 = params["conv1_b"].astype(f32).reshape(1, C1)

    # conv2: [O, I, 3, 3] -> [I, ky, kx, O] -> [I, 9*O]
    w2 = jnp.transpose(params["conv2_w"].astype(f32), (1, 2, 3, 0)
                       ).reshape(C1, 9 * C2).astype(bf16)              # [32, 144]
    b2 = params["conv2_b"].astype(f32).reshape(1, C2)

    # conv3: [1, I, 3, 3] -> [ky, kx, I] -> [9, 1, I]
    w3 = jnp.transpose(params["conv3_w"].astype(f32)[0], (1, 2, 0)).reshape(9, 1, C2)
    b3 = params["conv3_b"].astype(f32).reshape(1, 1)

    # tap-validity masks, packed lane-dense [P, 9]:
    # masks[p, t] = 1 iff the (dy, dx) neighbour of output pixel p is inside the chunk.
    m = np.zeros((P, 9), np.float32)
    for t in range(9):
        dy, dx = t // 3 - 1, t % 3 - 1
        for y in range(H):
            for x in range(W):
                if 0 <= y + dy < H and 0 <= x + dx < W:
                    m[y * W + x, t] = 1.0
    masks = jnp.asarray(m)

    # FC modulation path weights (stay in XLA, but pre-transposed once here).
    return dict(
        w1=w1, b1=b1, w2=w2, b2=b2, w3=w3, b3=b3, masks=masks,
        lat_wt=params["latent_fc_w"].astype(f32).T,
        lat_b=params["latent_fc_b"].astype(f32).reshape(1, -1),
        sty_wt=params["style_fc_w"].astype(f32).T,
        sty_b=params["style_fc_b"].astype(f32).reshape(1, -1),
        cmb_wt=params["combined_fc_w"].astype(f32).T,
        cmb_b=params["combined_fc_b"].astype(f32).reshape(1, -1),
    )


# ----------------------------------------------------------------------------- forward
def chunk_enhancer_forward(chunk, style, latent, prep, chunk_size):
    B, C, H, W = chunk.shape
    assert B == 1, "kernel implements the B == 1 case of the torch broadcast"
    assert C == C_IN and H == chunk_size and W == chunk_size
    P = H * W
    f32, bf16 = jnp.float32, jnp.bfloat16
    hp = lax.Precision.HIGHEST
    Cp = ((C + 127) // 128) * 128                                      # 257 -> 384

    # Only per-call data prep: chunk as [P, C] bf16, channel-padded to Cp.
    x = jnp.transpose(chunk[0].reshape(C, P)).astype(bf16)             # [P, 257]
    x = jnp.pad(x, ((0, 0), (0, Cp - C)))                              # [P, 384]

    # latent/style/combined FC modulation path (per-call, stays in XLA).
    lf = jnp.dot(latent.astype(f32), prep["lat_wt"], precision=hp) + prep["lat_b"]
    sf = jnp.dot(style.astype(f32), prep["sty_wt"], precision=hp) + prep["sty_b"]
    cat = jnp.concatenate([lf, sf], axis=1)
    comb = jnp.dot(cat, prep["cmb_wt"], precision=hp) + prep["cmb_b"]
    comb = _leaky(comb).reshape(P, 1)                                  # [P, 1]

    flops = 2 * P * Cp * 9 * C1 + 2 * P * C1 * 9 * C2 + 9 * P * (3 * C1 + 5 * C2)
    bytes_accessed = (x.size * 2 + prep["w1"].size * 2 + prep["w2"].size * 2
                      + (prep["masks"].size + prep["b1"].size + prep["b2"].size
                         + prep["w3"].size + prep["b3"].size + 2 * P) * 4)

    vmem = pl.BlockSpec(memory_space=pltpu.MemorySpace.VMEM)
    out_flat = pl.pallas_call(
        make_kernel(H, W),
        out_shape=jax.ShapeDtypeStruct((P, 1), f32),
        in_specs=[vmem] * 9,
        out_specs=vmem,
        cost_estimate=pl.CostEstimate(flops=flops, transcendentals=P,
                                      bytes_accessed=bytes_accessed),
        compiler_params=pltpu.CompilerParams(vmem_limit_bytes=32 * 1024 * 1024),
    )(x, prep["masks"], prep["w1"], prep["b1"], prep["w2"], prep["b2"],
      prep["w3"], prep["b3"], comb)

    return out_flat.reshape(1, 1, H, W)


# ----------------------------------------------------------------------------- reference
def ref_forward(chunk, style, latent, params, chunk_size):
    hp = lax.Precision.HIGHEST
    leaky = lambda v: jnp.where(v >= 0, v, LEAK * v)

    def conv(x, w, b):
        y = lax.conv_general_dilated(x, w, (1, 1), "SAME",
                                     dimension_numbers=("NCHW", "OIHW", "NCHW"),
                                     precision=hp)
        return y + b.reshape(1, -1, 1, 1)

    x = leaky(conv(chunk, params["conv1_w"], params["conv1_b"]))
    x = leaky(conv(x, params["conv2_w"], params["conv2_b"]))
    lf = jnp.dot(latent, params["latent_fc_w"].T, precision=hp) + params["latent_fc_b"]
    sf = jnp.dot(style, params["style_fc_w"].T, precision=hp) + params["style_fc_b"]
    combined = jnp.concatenate([lf, sf], axis=1)
    combined = leaky(jnp.dot(combined, params["combined_fc_w"].T, precision=hp)
                     + params["combined_fc_b"])
    combined = combined.reshape(1, -1, chunk_size, chunk_size)
    x = leaky(x * combined)
    return jax.nn.sigmoid(conv(x, params["conv3_w"], params["conv3_b"]))


# ----------------------------------------------------------------------------- setup / main
def init_params(key, style_dim, latent_dim, chunk_size):
    ks = jax.random.split(key, 12)

    def w(k, shape, scale=0.05):
        return (scale * jax.random.normal(k, shape)).astype(jnp.float32)

    return dict(
        conv1_w=w(ks[0], (32, 257, 3, 3)), conv1_b=w(ks[1], (32,)),
        conv2_w=w(ks[2], (16, 32, 3, 3)),  conv2_b=w(ks[3], (16,)),
        conv3_w=w(ks[4], (1, 16, 3, 3)),   conv3_b=w(ks[5], (1,)),
        latent_fc_w=w(ks[6], (32, latent_dim)), latent_fc_b=w(ks[7], (32,)),
        style_fc_w=w(ks[8], (32, style_dim)),   style_fc_b=w(ks[9], (32,)),
        combined_fc_w=w(ks[10], (chunk_size * chunk_size, 64)),
        combined_fc_b=w(ks[11], (chunk_size * chunk_size,)),
    )


if __name__ == "__main__":
    # ChunkEnhancer(style_dim=16, latent_dim=32, num_pos_encodings=unused, chunk_size=8)
    style_dim, latent_dim, chunk_size = 16, 32, 8

    key = jax.random.PRNGKey(0)
    kp, kc, ks_, kl = jax.random.split(key, 4)
    params = init_params(kp, style_dim, latent_dim, chunk_size)

    chunk = jax.random.normal(kc, (1, 257, chunk_size, chunk_size), jnp.float32)
    style = jax.random.normal(ks_, (1, style_dim), jnp.float32)
    latent = jax.random.normal(kl, (1, latent_dim), jnp.float32)

    # One-time weight re-layout (hoisted out of the per-call jitted path).
    prep = prepare_weights(params, chunk_size)

    fwd = jax.jit(functools.partial(chunk_enhancer_forward, chunk_size=chunk_size))
    out = jax.block_until_ready(fwd(chunk, style, latent, prep))
    ref = jax.block_until_ready(ref_forward(chunk, style, latent, params, chunk_size))

    assert out.shape == ref.shape == (1, 1, chunk_size, chunk_size)
    err = float(jnp.max(jnp.abs(out - ref)))
    if err > 5e-3:
        raise AssertionError(f"kernel / reference mismatch, max abs err = {err}")
    print("KERNEL_OK")
</pallas_src>

<mosaic_0001>
module attributes {stable_mosaic.version = 11 : i64} {
  func.func @kernel(%arg0: memref<64x384xbf16, #tpu.memory_space<vmem>>, %arg1: memref<64x9xf32, #tpu.memory_space<vmem>>, %arg2: memref<384x288xbf16, #tpu.memory_space<vmem>>, %arg3: memref<1x32xf32, #tpu.memory_space<vmem>>, %arg4: memref<32x144xbf16, #tpu.memory_space<vmem>>, %arg5: memref<1x16xf32, #tpu.memory_space<vmem>>, %arg6: memref<9x1x16xf32, #tpu.memory_space<vmem>>, %arg7: memref<1x1xf32, #tpu.memory_space<vmem>>, %arg8: memref<64x1xf32, #tpu.memory_space<vmem>>, %arg9: memref<64x1xf32, #tpu.memory_space<vmem>>) attributes {dimension_semantics = [], scalar_prefetch = 0 : i64, scratch_operands = 0 : i64, tpu.core_type = #tpu.core_type<tc>} {
    %c0 = arith.constant 0 : index
    %c0_0 = arith.constant 0 : index
    %0 = vector.load %arg1[%c0, %c0_0] : memref<64x9xf32, #tpu.memory_space<vmem>>, vector<64x9xf32>
    %c0_1 = arith.constant 0 : index
    %c0_2 = arith.constant 0 : index
    %c0_3 = arith.constant 0 : index
    %1 = vector.load %arg6[%c0_1, %c0_2, %c0_3] : memref<9x1x16xf32, #tpu.memory_space<vmem>>, vector<9x1x16xf32>
    %c0_4 = arith.constant 0 : index
    %c0_5 = arith.constant 0 : index
    %2 = vector.load %arg0[%c0_4, %c0_5] : memref<64x384xbf16, #tpu.memory_space<vmem>>, vector<64x384xbf16>
    %c0_6 = arith.constant 0 : index
    %c0_7 = arith.constant 0 : index
    %3 = vector.load %arg2[%c0_6, %c0_7] : memref<384x288xbf16, #tpu.memory_space<vmem>>, vector<384x288xbf16>
    %cst = arith.constant dense<0.000000e+00> : vector<64x288xf32>
    %4 = tpu.matmul %2, %3, %cst {dimension_numbers = #tpu.dot_dimension_numbers<[1], [0], [0], [1], [0, 0, 1, 1], [], []>} : vector<64x384xbf16>, vector<384x288xbf16>, vector<64x288xf32> -> vector<64x288xf32>
    %cst_8 = arith.constant 0.000000e+00 : f32
    %5 = vector.broadcast %cst_8 : f32 to vector<64x32xf32>
    %6 = vector.extract_strided_slice %4 {offsets = [0, 0], sizes = [64, 32], strides = [1, 1]} : vector<64x288xf32> to vector<64x32xf32>
    %c9_i32 = arith.constant 9 : i32
    %7 = tpu.dynamic_rotate %6 by %c9_i32 dim 0 : vector<64x32xf32>, i32 -> vector<64x32xf32>
    %8 = vector.extract_strided_slice %0 {offsets = [0, 0], sizes = [64, 1], strides = [1, 1]} : vector<64x9xf32> to vector<64x1xf32>
    %9 = vector.broadcast %8 : vector<64x1xf32> to vector<64x32xf32>
    %10 = arith.mulf %7, %9 : vector<64x32xf32>
    %11 = arith.addf %5, %10 : vector<64x32xf32>
    %12 = vector.extract_strided_slice %4 {offsets = [0, 32], sizes = [64, 32], strides = [1, 1]} : vector<64x288xf32> to vector<64x32xf32>
    %c8_i32 = arith.constant 8 : i32
    %13 = tpu.dynamic_rotate %12 by %c8_i32 dim 0 : vector<64x32xf32>, i32 -> vector<64x32xf32>
    %14 = vector.extract_strided_slice %0 {offsets = [0, 1], sizes = [64, 1], strides = [1, 1]} : vector<64x9xf32> to vector<64x1xf32>
    %15 = vector.broadcast %14 : vector<64x1xf32> to vector<64x32xf32>
    %16 = arith.mulf %13, %15 : vector<64x32xf32>
    %17 = arith.addf %11, %16 : vector<64x32xf32>
    %18 = vector.extract_strided_slice %4 {offsets = [0, 64], sizes = [64, 32], strides = [1, 1]} : vector<64x288xf32> to vector<64x32xf32>
    %c7_i32 = arith.constant 7 : i32
    %19 = tpu.dynamic_rotate %18 by %c7_i32 dim 0 : vector<64x32xf32>, i32 -> vector<64x32xf32>
    %20 = vector.extract_strided_slice %0 {offsets = [0, 2], sizes = [64, 1], strides = [1, 1]} : vector<64x9xf32> to vector<64x1xf32>
    %21 = vector.broadcast %20 : vector<64x1xf32> to vector<64x32xf32>
    %22 = arith.mulf %19, %21 : vector<64x32xf32>
    %23 = arith.addf %17, %22 : vector<64x32xf32>
    %24 = vector.extract_strided_slice %4 {offsets = [0, 96], sizes = [64, 32], strides = [1, 1]} : vector<64x288xf32> to vector<64x32xf32>
    %c1_i32 = arith.constant 1 : i32
    %25 = tpu.dynamic_rotate %24 by %c1_i32 dim 0 : vector<64x32xf32>, i32 -> vector<64x32xf32>
    %26 = vector.extract_strided_slice %0 {offsets = [0, 3], sizes = [64, 1], strides = [1, 1]} : vector<64x9xf32> to vector<64x1xf32>
    %27 = vector.broadcast %26 : vector<64x1xf32> to vector<64x32xf32>
    %28 = arith.mulf %25, %27 : vector<64x32xf32>
    %29 = arith.addf %23, %28 : vector<64x32xf32>
    %30 = vector.extract_strided_slice %4 {offsets = [0, 128], sizes = [64, 32], strides = [1, 1]} : vector<64x288xf32> to vector<64x32xf32>
    %31 = vector.extract_strided_slice %0 {offsets = [0, 4], sizes = [64, 1], strides = [1, 1]} : vector<64x9xf32> to vector<64x1xf32>
    %32 = vector.broadcast %31 : vector<64x1xf32> to vector<64x32xf32>
    %33 = arith.mulf %30, %32 : vector<64x32xf32>
    %34 = arith.addf %29, %33 : vector<64x32xf32>
    %35 = vector.extract_strided_slice %4 {offsets = [0, 160], sizes = [64, 32], strides = [1, 1]} : vector<64x288xf32> to vector<64x32xf32>
    %c63_i32 = arith.constant 63 : i32
    %36 = tpu.dynamic_rotate %35 by %c63_i32 dim 0 : vector<64x32xf32>, i32 -> vector<64x32xf32>
    %37 = vector.extract_strided_slice %0 {offsets = [0, 5], sizes = [64, 1], strides = [1, 1]} : vector<64x9xf32> to vector<64x1xf32>
    %38 = vector.broadcast %37 : vector<64x1xf32> to vector<64x32xf32>
    %39 = arith.mulf %36, %38 : vector<64x32xf32>
    %40 = arith.addf %34, %39 : vector<64x32xf32>
    %41 = vector.extract_strided_slice %4 {offsets = [0, 192], sizes = [64, 32], strides = [1, 1]} : vector<64x288xf32> to vector<64x32xf32>
    %c57_i32 = arith.constant 57 : i32
    %42 = tpu.dynamic_rotate %41 by %c57_i32 dim 0 : vector<64x32xf32>, i32 -> vector<64x32xf32>
    %43 = vector.extract_strided_slice %0 {offsets = [0, 6], sizes = [64, 1], strides = [1, 1]} : vector<64x9xf32> to vector<64x1xf32>
    %44 = vector.broadcast %43 : vector<64x1xf32> to vector<64x32xf32>
    %45 = arith.mulf %42, %44 : vector<64x32xf32>
    %46 = arith.addf %40, %45 : vector<64x32xf32>
    %47 = vector.extract_strided_slice %4 {offsets = [0, 224], sizes = [64, 32], strides = [1, 1]} : vector<64x288xf32> to vector<64x32xf32>
    %c56_i32 = arith.constant 56 : i32
    %48 = tpu.dynamic_rotate %47 by %c56_i32 dim 0 : vector<64x32xf32>, i32 -> vector<64x32xf32>
    %49 = vector.extract_strided_slice %0 {offsets = [0, 7], sizes = [64, 1], strides = [1, 1]} : vector<64x9xf32> to vector<64x1xf32>
    %50 = vector.broadcast %49 : vector<64x1xf32> to vector<64x32xf32>
    %51 = arith.mulf %48, %50 : vector<64x32xf32>
    %52 = arith.addf %46, %51 : vector<64x32xf32>
    %53 = vector.extract_strided_slice %4 {offsets = [0, 256], sizes = [64, 32], strides = [1, 1]} : vector<64x288xf32> to vector<64x32xf32>
    %c55_i32 = arith.constant 55 : i32
    %54 = tpu.dynamic_rotate %53 by %c55_i32 dim 0 : vector<64x32xf32>, i32 -> vector<64x32xf32>
    %55 = vector.extract_strided_slice %0 {offsets = [0, 8], sizes = [64, 1], strides = [1, 1]} : vector<64x9xf32> to vector<64x1xf32>
    %56 = vector.broadcast %55 : vector<64x1xf32> to vector<64x32xf32>
    %57 = arith.mulf %54, %56 : vector<64x32xf32>
    %58 = arith.addf %52, %57 : vector<64x32xf32>
    %c0_9 = arith.constant 0 : index
    %c0_10 = arith.constant 0 : index
    %59 = vector.load %arg3[%c0_9, %c0_10] : memref<1x32xf32, #tpu.memory_space<vmem>>, vector<1x32xf32>
    %60 = vector.broadcast %59 : vector<1x32xf32> to vector<64x32xf32>
    %61 = arith.addf %58, %60 : vector<64x32xf32>
    %cst_11 = arith.constant 0.000000e+00 : f32
    %62 = vector.broadcast %cst_11 : f32 to vector<64x32xf32>
    %63 = arith.cmpf oge, %61, %62 : vector<64x32xf32>
    %cst_12 = arith.constant 0.00999999977 : f32
    %64 = vector.broadcast %cst_12 : f32 to vector<64x32xf32>
    %65 = arith.mulf %64, %61 : vector<64x32xf32>
    %66 = arith.select %63, %61, %65 : vector<64x32xi1>, vector<64x32xf32>
    %67 = arith.truncf %66 : vector<64x32xf32> to vector<64x32xbf16>
    %c0_13 = arith.constant 0 : index
    %c0_14 = arith.constant 0 : index
    %68 = vector.load %arg4[%c0_13, %c0_14] : memref<32x144xbf16, #tpu.memory_space<vmem>>, vector<32x144xbf16>
    %cst_15 = arith.constant dense<0.000000e+00> : vector<64x144xf32>
    %69 = tpu.matmul %67, %68, %cst_15 {dimension_numbers = #tpu.dot_dimension_numbers<[1], [0], [0], [1], [0, 0, 1, 1], [], []>} : vector<64x32xbf16>, vector<32x144xbf16>, vector<64x144xf32> -> vector<64x144xf32>
    %cst_16 = arith.constant 0.000000e+00 : f32
    %70 = vector.broadcast %cst_16 : f32 to vector<64x16xf32>
    %71 = vector.extract_strided_slice %69 {offsets = [0, 0], sizes = [64, 16], strides = [1, 1]} : vector<64x144xf32> to vector<64x16xf32>
    %c9_i32_17 = arith.constant 9 : i32
    %72 = tpu.dynamic_rotate %71 by %c9_i32_17 dim 0 : vector<64x16xf32>, i32 -> vector<64x16xf32>
    %73 = vector.extract_strided_slice %0 {offsets = [0, 0], sizes = [64, 1], strides = [1, 1]} : vector<64x9xf32> to vector<64x1xf32>
    %74 = vector.broadcast %73 : vector<64x1xf32> to vector<64x16xf32>
    %75 = arith.mulf %72, %74 : vector<64x16xf32>
    %76 = arith.addf %70, %75 : vector<64x16xf32>
    %77 = vector.extract_strided_slice %69 {offsets = [0, 16], sizes = [64, 16], strides = [1, 1]} : vector<64x144xf32> to vector<64x16xf32>
    %c8_i32_18 = arith.constant 8 : i32
    %78 = tpu.dynamic_rotate %77 by %c8_i32_18 dim 0 : vector<64x16xf32>, i32 -> vector<64x16xf32>
    %79 = vector.extract_strided_slice %0 {offsets = [0, 1], sizes = [64, 1], strides = [1, 1]} : vector<64x9xf32> to vector<64x1xf32>
    %80 = vector.broadcast %79 : vector<64x1xf32> to vector<64x16xf32>
    %81 = arith.mulf %78, %80 : vector<64x16xf32>
    %82 = arith.addf %76, %81 : vector<64x16xf32>
    %83 = vector.extract_strided_slice %69 {offsets = [0, 32], sizes = [64, 16], strides = [1, 1]} : vector<64x144xf32> to vector<64x16xf32>
    %c7_i32_19 = arith.constant 7 : i32
    %84 = tpu.dynamic_rotate %83 by %c7_i32_19 dim 0 : vector<64x16xf32>, i32 -> vector<64x16xf32>
    %85 = vector.extract_strided_slice %0 {offsets = [0, 2], sizes = [64, 1], strides = [1, 1]} : vector<64x9xf32> to vector<64x1xf32>
    %86 = vector.broadcast %85 : vector<64x1xf32> to vector<64x16xf32>
    %87 = arith.mulf %84, %86 : vector<64x16xf32>
    %88 = arith.addf %82, %87 : vector<64x16xf32>
    %89 = vector.extract_strided_slice %69 {offsets = [0, 48], sizes = [64, 16], strides = [1, 1]} : vector<64x144xf32> to vector<64x16xf32>
    %c1_i32_20 = arith.constant 1 : i32
    %90 = tpu.dynamic_rotate %89 by %c1_i32_20 dim 0 : vector<64x16xf32>, i32 -> vector<64x16xf32>
    %91 = vector.extract_strided_slice %0 {offsets = [0, 3], sizes = [64, 1], strides = [1, 1]} : vector<64x9xf32> to vector<64x1xf32>
    %92 = vector.broadcast %91 : vector<64x1xf32> to vector<64x16xf32>
    %93 = arith.mulf %90, %92 : vector<64x16xf32>
    %94 = arith.addf %88, %93 : vector<64x16xf32>
    %95 = vector.extract_strided_slice %69 {offsets = [0, 64], sizes = [64, 16], strides = [1, 1]} : vector<64x144xf32> to vector<64x16xf32>
    %96 = vector.extract_strided_slice %0 {offsets = [0, 4], sizes = [64, 1], strides = [1, 1]} : vector<64x9xf32> to vector<64x1xf32>
    %97 = vector.broadcast %96 : vector<64x1xf32> to vector<64x16xf32>
    %98 = arith.mulf %95, %97 : vector<64x16xf32>
    %99 = arith.addf %94, %98 : vector<64x16xf32>
    %100 = vector.extract_strided_slice %69 {offsets = [0, 80], sizes = [64, 16], strides = [1, 1]} : vector<64x144xf32> to vector<64x16xf32>
    %c63_i32_21 = arith.constant 63 : i32
    %101 = tpu.dynamic_rotate %100 by %c63_i32_21 dim 0 : vector<64x16xf32>, i32 -> vector<64x16xf32>
    %102 = vector.extract_strided_slice %0 {offsets = [0, 5], sizes = [64, 1], strides = [1, 1]} : vector<64x9xf32> to vector<64x1xf32>
    %103 = vector.broadcast %102 : vector<64x1xf32> to vector<64x16xf32>
    %104 = arith.mulf %101, %103 : vector<64x16xf32>
    %105 = arith.addf %99, %104 : vector<64x16xf32>
    %106 = vector.extract_strided_slice %69 {offsets = [0, 96], sizes = [64, 16], strides = [1, 1]} : vector<64x144xf32> to vector<64x16xf32>
    %c57_i32_22 = arith.constant 57 : i32
    %107 = tpu.dynamic_rotate %106 by %c57_i32_22 dim 0 : vector<64x16xf32>, i32 -> vector<64x16xf32>
    %108 = vector.extract_strided_slice %0 {offsets = [0, 6], sizes = [64, 1], strides = [1, 1]} : vector<64x9xf32> to vector<64x1xf32>
    %109 = vector.broadcast %108 : vector<64x1xf32> to vector<64x16xf32>
    %110 = arith.mulf %107, %109 : vector<64x16xf32>
    %111 = arith.addf %105, %110 : vector<64x16xf32>
    %112 = vector.extract_strided_slice %69 {offsets = [0, 112], sizes = [64, 16], strides = [1, 1]} : vector<64x144xf32> to vector<64x16xf32>
    %c56_i32_23 = arith.constant 56 : i32
    %113 = tpu.dynamic_rotate %112 by %c56_i32_23 dim 0 : vector<64x16xf32>, i32 -> vector<64x16xf32>
    %114 = vector.extract_strided_slice %0 {offsets = [0, 7], sizes = [64, 1], strides = [1, 1]} : vector<64x9xf32> to vector<64x1xf32>
    %115 = vector.broadcast %114 : vector<64x1xf32> to vector<64x16xf32>
    %116 = arith.mulf %113, %115 : vector<64x16xf32>
    %117 = arith.addf %111, %116 : vector<64x16xf32>
    %118 = vector.extract_strided_slice %69 {offsets = [0, 128], sizes = [64, 16], strides = [1, 1]} : vector<64x144xf32> to vector<64x16xf32>
    %c55_i32_24 = arith.constant 55 : i32
    %119 = tpu.dynamic_rotate %118 by %c55_i32_24 dim 0 : vector<64x16xf32>, i32 -> vector<64x16xf32>
    %120 = vector.extract_strided_slice %0 {offsets = [0, 8], sizes = [64, 1], strides = [1, 1]} : vector<64x9xf32> to vector<64x1xf32>
    %121 = vector.broadcast %120 : vector<64x1xf32> to vector<64x16xf32>
    %122 = arith.mulf %119, %121 : vector<64x16xf32>
    %123 = arith.addf %117, %122 : vector<64x16xf32>
    %c0_25 = arith.constant 0 : index
    %c0_26 = arith.constant 0 : index
    %124 = vector.load %arg5[%c0_25, %c0_26] : memref<1x16xf32, #tpu.memory_space<vmem>>, vector<1x16xf32>
    %125 = vector.broadcast %124 : vector<1x16xf32> to vector<64x16xf32>
    %126 = arith.addf %123, %125 : vector<64x16xf32>
    %cst_27 = arith.constant 0.000000e+00 : f32
    %127 = vector.broadcast %cst_27 : f32 to vector<64x16xf32>
    %128 = arith.cmpf oge, %126, %127 : vector<64x16xf32>
    %cst_28 = arith.constant 0.00999999977 : f32
    %129 = vector.broadcast %cst_28 : f32 to vector<64x16xf32>
    %130 = arith.mulf %129, %126 : vector<64x16xf32>
    %131 = arith.select %128, %126, %130 : vector<64x16xi1>, vector<64x16xf32>
    %c0_29 = arith.constant 0 : index
    %c0_30 = arith.constant 0 : index
    %132 = vector.load %arg8[%c0_29, %c0_30] : memref<64x1xf32, #tpu.memory_space<vmem>>, vector<64x1xf32>
    %133 = vector.broadcast %132 : vector<64x1xf32> to vector<64x16xf32>
    %134 = arith.mulf %131, %133 : vector<64x16xf32>
    %cst_31 = arith.constant 0.000000e+00 : f32
    %135 = vector.broadcast %cst_31 : f32 to vector<64x16xf32>
    %136 = arith.cmpf oge, %134, %135 : vector<64x16xf32>
    %cst_32 = arith.constant 0.00999999977 : f32
    %137 = vector.broadcast %cst_32 : f32 to vector<64x16xf32>
    %138 = arith.mulf %137, %134 : vector<64x16xf32>
    %139 = arith.select %136, %134, %138 : vector<64x16xi1>, vector<64x16xf32>
    %cst_33 = arith.constant 0.000000e+00 : f32
    %140 = vector.broadcast %cst_33 : f32 to vector<64x16xf32>
    %c9_i32_34 = arith.constant 9 : i32
    %141 = tpu.dynamic_rotate %139 by %c9_i32_34 dim 0 : vector<64x16xf32>, i32 -> vector<64x16xf32>
    %142 = vector.extract_strided_slice %0 {offsets = [0, 0], sizes = [64, 1], strides = [1, 1]} : vector<64x9xf32> to vector<64x1xf32>
    %143 = vector.broadcast %142 : vector<64x1xf32> to vector<64x16xf32>
    %144 = arith.mulf %141, %143 : vector<64x16xf32>
    %145 = vector.extract_strided_slice %1 {offsets = [0, 0, 0], sizes = [1, 1, 16], strides = [1, 1, 1]} : vector<9x1x16xf32> to vector<1x1x16xf32>
    %146 = vector.shape_cast %145 : vector<1x1x16xf32> to vector<1x16xf32>
    %147 = vector.broadcast %146 : vector<1x16xf32> to vector<64x16xf32>
    %148 = arith.mulf %144, %147 : vector<64x16xf32>
    %149 = arith.addf %140, %148 : vector<64x16xf32>
    %c8_i32_35 = arith.constant 8 : i32
    %150 = tpu.dynamic_rotate %139 by %c8_i32_35 dim 0 : vector<64x16xf32>, i32 -> vector<64x16xf32>
    %151 = vector.extract_strided_slice %0 {offsets = [0, 1], sizes = [64, 1], strides = [1, 1]} : vector<64x9xf32> to vector<64x1xf32>
    %152 = vector.broadcast %151 : vector<64x1xf32> to vector<64x16xf32>
    %153 = arith.mulf %150, %152 : vector<64x16xf32>
    %154 = vector.extract_strided_slice %1 {offsets = [1, 0, 0], sizes = [1, 1, 16], strides = [1, 1, 1]} : vector<9x1x16xf32> to vector<1x1x16xf32>
    %155 = vector.shape_cast %154 : vector<1x1x16xf32> to vector<1x16xf32>
    %156 = vector.broadcast %155 : vector<1x16xf32> to vector<64x16xf32>
    %157 = arith.mulf %153, %156 : vector<64x16xf32>
    %158 = arith.addf %149, %157 : vector<64x16xf32>
    %c7_i32_36 = arith.constant 7 : i32
    %159 = tpu.dynamic_rotate %139 by %c7_i32_36 dim 0 : vector<64x16xf32>, i32 -> vector<64x16xf32>
    %160 = vector.extract_strided_slice %0 {offsets = [0, 2], sizes = [64, 1], strides = [1, 1]} : vector<64x9xf32> to vector<64x1xf32>
    %161 = vector.broadcast %160 : vector<64x1xf32> to vector<64x16xf32>
    %162 = arith.mulf %159, %161 : vector<64x16xf32>
    %163 = vector.extract_strided_slice %1 {offsets = [2, 0, 0], sizes = [1, 1, 16], strides = [1, 1, 1]} : vector<9x1x16xf32> to vector<1x1x16xf32>
    %164 = vector.shape_cast %163 : vector<1x1x16xf32> to vector<1x16xf32>
    %165 = vector.broadcast %164 : vector<1x16xf32> to vector<64x16xf32>
    %166 = arith.mulf %162, %165 : vector<64x16xf32>
    %167 = arith.addf %158, %166 : vector<64x16xf32>
    %c1_i32_37 = arith.constant 1 : i32
    %168 = tpu.dynamic_rotate %139 by %c1_i32_37 dim 0 : vector<64x16xf32>, i32 -> vector<64x16xf32>
    %169 = vector.extract_strided_slice %0 {offsets = [0, 3], sizes = [64, 1], strides = [1, 1]} : vector<64x9xf32> to vector<64x1xf32>
    %170 = vector.broadcast %169 : vector<64x1xf32> to vector<64x16xf32>
    %171 = arith.mulf %168, %170 : vector<64x16xf32>
    %172 = vector.extract_strided_slice %1 {offsets = [3, 0, 0], sizes = [1, 1, 16], strides = [1, 1, 1]} : vector<9x1x16xf32> to vector<1x1x16xf32>
    %173 = vector.shape_cast %172 : vector<1x1x16xf32> to vector<1x16xf32>
    %174 = vector.broadcast %173 : vector<1x16xf32> to vector<64x16xf32>
    %175 = arith.mulf %171, %174 : vector<64x16xf32>
    %176 = arith.addf %167, %175 : vector<64x16xf32>
    %177 = vector.extract_strided_slice %0 {offsets = [0, 4], sizes = [64, 1], strides = [1, 1]} : vector<64x9xf32> to vector<64x1xf32>
    %178 = vector.broadcast %177 : vector<64x1xf32> to vector<64x16xf32>
    %179 = arith.mulf %139, %178 : vector<64x16xf32>
    %180 = vector.extract_strided_slice %1 {offsets = [4, 0, 0], sizes = [1, 1, 16], strides = [1, 1, 1]} : vector<9x1x16xf32> to vector<1x1x16xf32>
    %181 = vector.shape_cast %180 : vector<1x1x16xf32> to vector<1x16xf32>
    %182 = vector.broadcast %181 : vector<1x16xf32> to vector<64x16xf32>
    %183 = arith.mulf %179, %182 : vector<64x16xf32>
    %184 = arith.addf %176, %183 : vector<64x16xf32>
    %c63_i32_38 = arith.constant 63 : i32
    %185 = tpu.dynamic_rotate %139 by %c63_i32_38 dim 0 : vector<64x16xf32>, i32 -> vector<64x16xf32>
    %186 = vector.extract_strided_slice %0 {offsets = [0, 5], sizes = [64, 1], strides = [1, 1]} : vector<64x9xf32> to vector<64x1xf32>
    %187 = vector.broadcast %186 : vector<64x1xf32> to vector<64x16xf32>
    %188 = arith.mulf %185, %187 : vector<64x16xf32>
    %189 = vector.extract_strided_slice %1 {offsets = [5, 0, 0], sizes = [1, 1, 16], strides = [1, 1, 1]} : vector<9x1x16xf32> to vector<1x1x16xf32>
    %190 = vector.shape_cast %189 : vector<1x1x16xf32> to vector<1x16xf32>
    %191 = vector.broadcast %190 : vector<1x16xf32> to vector<64x16xf32>
    %192 = arith.mulf %188, %191 : vector<64x16xf32>
    %193 = arith.addf %184, %192 : vector<64x16xf32>
    %c57_i32_39 = arith.constant 57 : i32
    %194 = tpu.dynamic_rotate %139 by %c57_i32_39 dim 0 : vector<64x16xf32>, i32 -> vector<64x16xf32>
    %195 = vector.extract_strided_slice %0 {offsets = [0, 6], sizes = [64, 1], strides = [1, 1]} : vector<64x9xf32> to vector<64x1xf32>
    %196 = vector.broadcast %195 : vector<64x1xf32> to vector<64x16xf32>
    %197 = arith.mulf %194, %196 : vector<64x16xf32>
    %198 = vector.extract_strided_slice %1 {offsets = [6, 0, 0], sizes = [1, 1, 16], strides = [1, 1, 1]} : vector<9x1x16xf32> to vector<1x1x16xf32>
    %199 = vector.shape_cast %198 : vector<1x1x16xf32> to vector<1x16xf32>
    %200 = vector.broadcast %199 : vector<1x16xf32> to vector<64x16xf32>
    %201 = arith.mulf %197, %200 : vector<64x16xf32>
    %202 = arith.addf %193, %201 : vector<64x16xf32>
    %c56_i32_40 = arith.constant 56 : i32
    %203 = tpu.dynamic_rotate %139 by %c56_i32_40 dim 0 : vector<64x16xf32>, i32 -> vector<64x16xf32>
    %204 = vector.extract_strided_slice %0 {offsets = [0, 7], sizes = [64, 1], strides = [1, 1]} : vector<64x9xf32> to vector<64x1xf32>
    %205 = vector.broadcast %204 : vector<64x1xf32> to vector<64x16xf32>
    %206 = arith.mulf %203, %205 : vector<64x16xf32>
    %207 = vector.extract_strided_slice %1 {offsets = [7, 0, 0], sizes = [1, 1, 16], strides = [1, 1, 1]} : vector<9x1x16xf32> to vector<1x1x16xf32>
    %208 = vector.shape_cast %207 : vector<1x1x16xf32> to vector<1x16xf32>
    %209 = vector.broadcast %208 : vector<1x16xf32> to vector<64x16xf32>
    %210 = arith.mulf %206, %209 : vector<64x16xf32>
    %211 = arith.addf %202, %210 : vector<64x16xf32>
    %c55_i32_41 = arith.constant 55 : i32
    %212 = tpu.dynamic_rotate %139 by %c55_i32_41 dim 0 : vector<64x16xf32>, i32 -> vector<64x16xf32>
    %213 = vector.extract_strided_slice %0 {offsets = [0, 8], sizes = [64, 1], strides = [1, 1]} : vector<64x9xf32> to vector<64x1xf32>
    %214 = vector.broadcast %213 : vector<64x1xf32> to vector<64x16xf32>
    %215 = arith.mulf %212, %214 : vector<64x16xf32>
    %216 = vector.extract_strided_slice %1 {offsets = [8, 0, 0], sizes = [1, 1, 16], strides = [1, 1, 1]} : vector<9x1x16xf32> to vector<1x1x16xf32>
    %217 = vector.shape_cast %216 : vector<1x1x16xf32> to vector<1x16xf32>
    %218 = vector.broadcast %217 : vector<1x16xf32> to vector<64x16xf32>
    %219 = arith.mulf %215, %218 : vector<64x16xf32>
    %220 = arith.addf %211, %219 : vector<64x16xf32>
    %cst_42 = arith.constant dense<0.000000e+00> : vector<64xf32>
    %221 = vector.multi_reduction <add>, %220, %cst_42 [1] : vector<64x16xf32> to vector<64xf32>
    %222 = vector.shape_cast %221 : vector<64xf32> to vector<64x1xf32>
    %c0_43 = arith.constant 0 : index
    %c0_44 = arith.constant 0 : index
    %223 = vector.load %arg7[%c0_43, %c0_44] : memref<1x1xf32, #tpu.memory_space<vmem>>, vector<1x1xf32>
    %224 = vector.broadcast %223 : vector<1x1xf32> to vector<64x1xf32>
    %225 = arith.addf %222, %224 : vector<64x1xf32>
    %cst_45 = arith.constant 0.000000e+00 : f32
    %226 = vector.broadcast %cst_45 : f32 to vector<64x1xf32>
    %227 = arith.subf %226, %225 : vector<64x1xf32>
    %228 = math.exp %227 : vector<64x1xf32>
    %cst_46 = arith.constant 1.000000e+00 : f32
    %229 = vector.broadcast %cst_46 : f32 to vector<64x1xf32>
    %230 = arith.addf %229, %228 : vector<64x1xf32>
    %cst_47 = arith.constant 1.000000e+00 : f32
    %231 = vector.broadcast %cst_47 : f32 to vector<64x1xf32>
    %232 = arith.divf %231, %230 : vector<64x1xf32>
    %c0_48 = arith.constant 0 : index
    %c0_49 = arith.constant 0 : index
    %233 = vector.load %arg9[%c0_48, %c0_49] : memref<64x1xf32, #tpu.memory_space<vmem>>, vector<64x1xf32>
    tpu.vector_store %arg9[%c0_48, %c0_49], %232 {strides = array<i32>} : memref<64x1xf32, #tpu.memory_space<vmem>>, vector<64x1xf32>,
    return
  }
}

</mosaic_0001>

<llo_original>
// kernel: chunk_enhancer_forward.1
$region0: #{chunk_enhancer_forward.1}
  #allocation0 [shape = 'u32[]', space=smem, size = 0x4, offset = 0x4, fixed_abs, tag = 'smem constant byte address 0x4 - core index']
  #allocation1 [shape = 'u32[144,128]{1,0:T(1,128)}', space=vmem, size = 0x12000, scoped, tag = 'internal scratch']
  #allocation2 [shape = 'f32[1,1]{1,0:T(1,128)S(1)}', space=vmem, size = 0x200, scoped, tag = 'scoped memory for chunk_enhancer_forward.1']
  %s0 = inlined_call_operand.vmem [shape: bf16[64,384], index: 0, kind: input, shape index: {}]
  %s1 = inlined_call_operand.vmem [shape: f32[64,9], index: 1, kind: input, shape index: {}]
  %s2 = inlined_call_operand.vmem [shape: bf16[384,288], index: 2, kind: input, shape index: {}]
  %s3 = inlined_call_operand.vmem [shape: f32[1,32], index: 3, kind: input, shape index: {}]
  %s4 = inlined_call_operand.vmem [shape: bf16[32,144], index: 4, kind: input, shape index: {}]
  %s5 = inlined_call_operand.vmem [shape: f32[1,16], index: 5, kind: input, shape index: {}]
  %s6 = inlined_call_operand.vmem [shape: f32[9,1,16], index: 6, kind: input, shape index: {}]
  %s7 = inlined_call_operand.<no memory space> [shape: f32[1,1], index: 7, kind: input, shape index: {}]
  %s8 = inlined_call_operand.vmem [shape: f32[64,1], index: 8, kind: input, shape index: {}]
  %s9 = inlined_call_operand.vmem [shape: f32[64,1], index: 9, kind: output, shape index: {}]
  %s10 = sld [smem:[#allocation0]]
  $region46: #{chunk_enhancer_forward.1} parent=0
    _
  %s12 = ssub.s32 1, %s10
  %s13 = scalar_select 0, %s12, %s10
  %v14 = vstv %s7
  %15 = vst [vmem:[#allocation2] sm:$0x1] %v14
  // Predicated region
  $region2: #{chunk_enhancer_forward.1} parent=0 // pred_check
    _
  $region3: #{chunk_enhancer_forward.1} parent=0 // pred_check_branch
    %17 = sbr.rel (0) target = $region5
  $region4: #{chunk_enhancer_forward.1} parent=0 // pred_region
    _
  $region5: #{chunk_enhancer_forward.1} parent=0 // pred_fallthru
    _
  // Predicated region
  $region6: #{chunk_enhancer_forward.1} parent=0 // pred_check
    _
  $region7: #{chunk_enhancer_forward.1} parent=0 // pred_check_branch
    %19 = sbr.rel (0) target = $region9
  $region8: #{chunk_enhancer_forward.1} parent=0 // pred_region
    _
  $region9: #{chunk_enhancer_forward.1} parent=0 // pred_fallthru
    _
  // Predicated region
  $region10: #{chunk_enhancer_forward.1} parent=0 // pred_check
    _
  $region11: #{chunk_enhancer_forward.1} parent=0 // pred_check_branch
    %21 = sbr.rel (0) target = $region13
  $region12: #{chunk_enhancer_forward.1} parent=0 // pred_region
    _
  $region13: #{chunk_enhancer_forward.1} parent=0 // pred_fallthru
    _
  // Predicated region
  $region14: #{chunk_enhancer_forward.1} parent=0 // pred_check
    _
  $region15: #{chunk_enhancer_forward.1} parent=0 // pred_check_branch
    %23 = sbr.rel (0) target = $region17
  $region16: #{chunk_enhancer_forward.1} parent=0 // pred_region
    _
  $region17: #{chunk_enhancer_forward.1} parent=0 // pred_fallthru
    _
  // Predicated region
  $region18: #{chunk_enhancer_forward.1} parent=0 // pred_check
    _
  $region19: #{chunk_enhancer_forward.1} parent=0 // pred_check_branch
    %25 = sbr.rel (0) target = $region21
  $region20: #{chunk_enhancer_forward.1} parent=0 // pred_region
    _
  $region21: #{chunk_enhancer_forward.1} parent=0 // pred_fallthru
    _
  // Predicated region
  $region22: #{chunk_enhancer_forward.1} parent=0 // pred_check
    _
  $region23: #{chunk_enhancer_forward.1} parent=0 // pred_check_branch
    %27 = sbr.rel (0) target = $region25
  $region24: #{chunk_enhancer_forward.1} parent=0 // pred_region
    _
  $region25: #{chunk_enhancer_forward.1} parent=0 // pred_fallthru
    _
  // Predicated region
  $region26: #{chunk_enhancer_forward.1} parent=0 // pred_check
    _
  $region27: #{chunk_enhancer_forward.1} parent=0 // pred_check_branch
    %29 = sbr.rel (0) target = $region29
  $region28: #{chunk_enhancer_forward.1} parent=0 // pred_region
    _
  $region29: #{chunk_enhancer_forward.1} parent=0 // pred_fallthru
    _
  // Predicated region
  $region30: #{chunk_enhancer_forward.1} parent=0 // pred_check
    _
  $region31: #{chunk_enhancer_forward.1} parent=0 // pred_check_branch
    %31 = sbr.rel (0) target = $region33
  $region32: #{chunk_enhancer_forward.1} parent=0 // pred_region
    _
  $region33: #{chunk_enhancer_forward.1} parent=0 // pred_fallthru
    _
  // Predicated region
  $region34: #{chunk_enhancer_forward.1} parent=0 // pred_check
    _
  $region35: #{chunk_enhancer_forward.1} parent=0 // pred_check_branch
    %33 = sbr.rel (0) target = $region37
  $region36: #{chunk_enhancer_forward.1} parent=0 // pred_region
    _
  $region37: #{chunk_enhancer_forward.1} parent=0 // pred_fallthru
    _
  %v35 = vld [vmem:[%s1] sm:$0xff]
  %v36 = vld [vmem:[%s1 + $0x8] sm:$0xff]
  %v37 = vld [vmem:[%s1 + $0x10] sm:$0xff]
  %v38 = vld [vmem:[%s1 + $0x18] sm:$0xff]
  %v39 = vld [vmem:[%s1 + $0x20] sm:$0xff]
  %v40 = vld [vmem:[%s1 + $0x28] sm:$0xff]
  %v41 = vld [vmem:[%s1 + $0x30] sm:$0xff]
  %v42 = vld [vmem:[%s1 + $0x38] sm:$0xff]
  %v43 = vld [vmem:[%s6] sm:$0x1]
  %v44 = vld [vmem:[%s6 + $0x1] sm:$0x1]
  %v45 = vld [vmem:[%s6 + $0x2] sm:$0x1]
  %v46 = vld [vmem:[%s6 + $0x3] sm:$0x1]
  %v47 = vld [vmem:[%s6 + $0x4] sm:$0x1]
  %v48 = vld [vmem:[%s6 + $0x5] sm:$0x1]
  %v49 = vld [vmem:[%s6 + $0x6] sm:$0x1]
  %v50 = vld [vmem:[%s6 + $0x7] sm:$0x1]
  %v51 = vld [vmem:[%s6 + $0x8] sm:$0x1]
  %v52 = vld [vmem:[%s0] sm:$0xff]
  %v53 = vld [vmem:[%s0 + $0x8] sm:$0xf]
  %v54 = vld [vmem:[%s0 + $0xc] sm:$0xff]
  %v55 = vld [vmem:[%s0 + $0x14] sm:$0xf]
  %v56 = vld [vmem:[%s0 + $0x18] sm:$0xff]
  %v57 = vld [vmem:[%s0 + $0x20] sm:$0xf]
  %v58 = vld [vmem:[%s0 + $0x24] sm:$0xff]
  %v59 = vld [vmem:[%s0 + $0x2c] sm:$0xf]
  %v60 = vld [vmem:[%s0 + $0x30] sm:$0xff]
  %v61 = vld [vmem:[%s0 + $0x38] sm:$0xf]
  %v62 = vld [vmem:[%s0 + $0x3c] sm:$0xff]
  %v63 = vld [vmem:[%s0 + $0x44] sm:$0xf]
  %v64 = vld [vmem:[%s0 + $0x48] sm:$0xff]
  %v65 = vld [vmem:[%s0 + $0x50] sm:$0xf]
  %v66 = vld [vmem:[%s0 + $0x54] sm:$0xff]
  %v67 = vld [vmem:[%s0 + $0x5c] sm:$0xf]
  %v68 = vld [vmem:[%s2] sm:$0xff]
  %v69 = vld [vmem:[%s2 + $0x8] sm:$0xf]
  %v70 = vld [vmem:[%s2 + $0xc] sm:$0xff]
  %v71 = vld [vmem:[%s2 + $0x14] sm:$0xf]
  %v72 = vld [vmem:[%s2 + $0x18] sm:$0xff]
  %v73 = vld [vmem:[%s2 + $0x20] sm:$0xf]
  %v74 = vld [vmem:[%s2 + $0x24] sm:$0xff]
  %v75 = vld [vmem:[%s2 + $0x2c] sm:$0xf]
  %v76 = vld [vmem:[%s2 + $0x30] sm:$0xff]
  %v77 = vld [vmem:[%s2 + $0x38] sm:$0xf]
  %v78 = vld [vmem:[%s2 + $0x3c] sm:$0xff]
  %v79 = vld [vmem:[%s2 + $0x44] sm:$0xf]
  %v80 = vld [vmem:[%s2 + $0x48] sm:$0xff]
  %v81 = vld [vmem:[%s2 + $0x50] sm:$0xf]
  %v82 = vld [vmem:[%s2 + $0x54] sm:$0xff]
  %v83 = vld [vmem:[%s2 + $0x5c] sm:$0xf]
  %v84 = vld [vmem:[%s2 + $0x60] sm:$0xff]
  %v85 = vld [vmem:[%s2 + $0x68] sm:$0xf]
  %v86 = vld [vmem:[%s2 + $0x6c] sm:$0xff]
  %v87 = vld [vmem:[%s2 + $0x74] sm:$0xf]
  %v88 = vld [vmem:[%s2 + $0x78] sm:$0xff]
  %v89 = vld [vmem:[%s2 + $0x80] sm:$0xf]
  %v90 = vld [vmem:[%s2 + $0x84] sm:$0xff]
  %v91 = vld [vmem:[%s2 + $0x8c] sm:$0xf]
  %v92 = vld [vmem:[%s2 + $0x90] sm:$0xff]
  %v93 = vld [vmem:[%s2 + $0x98] sm:$0xf]
  %v94 = vld [vmem:[%s2 + $0x9c] sm:$0xff]
  %v95 = vld [vmem:[%s2 + $0xa4] sm:$0xf]
  %v96 = vld [vmem:[%s2 + $0xa8] sm:$0xff]
  %v97 = vld [vmem:[%s2 + $0xb0] sm:$0xf]
  %v98 = vld [vmem:[%s2 + $0xb4] sm:$0xff]
  %v99 = vld [vmem:[%s2 + $0xbc] sm:$0xf]
  %v100 = vld [vmem:[%s2 + $0xc0] sm:$0xff]
  %v101 = vld [vmem:[%s2 + $0xc8] sm:$0xf]
  %v102 = vld [vmem:[%s2 + $0xcc] sm:$0xff]
  %v103 = vld [vmem:[%s2 + $0xd4] sm:$0xf]
  %v104 = vld [vmem:[%s2 + $0xd8] sm:$0xff]
  %v105 = vld [vmem:[%s2 + $0xe0] sm:$0xf]
  %v106 = vld [vmem:[%s2 + $0xe4] sm:$0xff]
  %v107 = vld [vmem:[%s2 + $0xec] sm:$0xf]
  %v108 = vld [vmem:[%s2 + $0xf0] sm:$0xff]
  %v109 = vld [vmem:[%s2 + $0xf8] sm:$0xf]
  %v110 = vld [vmem:[%s2 + $0xfc] sm:$0xff]
  %v111 = vld [vmem:[%s2 + $0x104] sm:$0xf]
  %v112 = vld [vmem:[%s2 + $0x108] sm:$0xff]
  %v113 = vld [vmem:[%s2 + $0x110] sm:$0xf]
  %v114 = vld [vmem:[%s2 + $0x114] sm:$0xff]
  %v115 = vld [vmem:[%s2 + $0x11c] sm:$0xf]
  %v116 = vld [vmem:[%s2 + $0x120] sm:$0xff]
  %v117 = vld [vmem:[%s2 + $0x128] sm:$0xf]
  %v118 = vld [vmem:[%s2 + $0x12c] sm:$0xff]
  %v119 = vld [vmem:[%s2 + $0x134] sm:$0xf]
  %v120 = vld [vmem:[%s2 + $0x138] sm:$0xff]
  %v121 = vld [vmem:[%s2 + $0x140] sm:$0xf]
  %v122 = vld [vmem:[%s2 + $0x144] sm:$0xff]
  %v123 = vld [vmem:[%s2 + $0x14c] sm:$0xf]
  %v124 = vld [vmem:[%s2 + $0x150] sm:$0xff]
  %v125 = vld [vmem:[%s2 + $0x158] sm:$0xf]
  %v126 = vld [vmem:[%s2 + $0x15c] sm:$0xff]
  %v127 = vld [vmem:[%s2 + $0x164] sm:$0xf]
  %v128 = vld [vmem:[%s2 + $0x168] sm:$0xff]
  %v129 = vld [vmem:[%s2 + $0x170] sm:$0xf]
  %v130 = vld [vmem:[%s2 + $0x174] sm:$0xff]
  %v131 = vld [vmem:[%s2 + $0x17c] sm:$0xf]
  %v132 = vld [vmem:[%s2 + $0x180] sm:$0xff]
  %v133 = vld [vmem:[%s2 + $0x188] sm:$0xf]
  %v134 = vld [vmem:[%s2 + $0x18c] sm:$0xff]
  %v135 = vld [vmem:[%s2 + $0x194] sm:$0xf]
  %v136 = vld [vmem:[%s2 + $0x198] sm:$0xff]
  %v137 = vld [vmem:[%s2 + $0x1a0] sm:$0xf]
  %v138 = vld [vmem:[%s2 + $0x1a4] sm:$0xff]
  %v139 = vld [vmem:[%s2 + $0x1ac] sm:$0xf]
  %v140 = vld [vmem:[%s2 + $0x1b0] sm:$0xff]
  %v141 = vld [vmem:[%s2 + $0x1b8] sm:$0xf]
  %v142 = vld [vmem:[%s2 + $0x1bc] sm:$0xff]
  %v143 = vld [vmem:[%s2 + $0x1c4] sm:$0xf]
  %v144 = vld [vmem:[%s2 + $0x1c8] sm:$0xff]
  %v145 = vld [vmem:[%s2 + $0x1d0] sm:$0xf]
  %v146 = vld [vmem:[%s2 + $0x1d4] sm:$0xff]
  %v147 = vld [vmem:[%s2 + $0x1dc] sm:$0xf]
  %v148 = vld [vmem:[%s2 + $0x1e0] sm:$0xff]
  %v149 = vld [vmem:[%s2 + $0x1e8] sm:$0xf]
  %v150 = vld [vmem:[%s2 + $0x1ec] sm:$0xff]
  %v151 = vld [vmem:[%s2 + $0x1f4] sm:$0xf]
  %v152 = vld [vmem:[%s2 + $0x1f8] sm:$0xff]
  %v153 = vld [vmem:[%s2 + $0x200] sm:$0xf]
  %v154 = vld [vmem:[%s2 + $0x204] sm:$0xff]
  %v155 = vld [vmem:[%s2 + $0x20c] sm:$0xf]
  %v156 = vld [vmem:[%s2 + $0x210] sm:$0xff]
  %v157 = vld [vmem:[%s2 + $0x218] sm:$0xf]
  %v158 = vld [vmem:[%s2 + $0x21c] sm:$0xff]
  %v159 = vld [vmem:[%s2 + $0x224] sm:$0xf]
  %v160 = vld [vmem:[%s2 + $0x228] sm:$0xff]
  %v161 = vld [vmem:[%s2 + $0x230] sm:$0xf]
  %v162 = vld [vmem:[%s2 + $0x234] sm:$0xff]
  %v163 = vld [vmem:[%s2 + $0x23c] sm:$0xf]
  %v180 = vunpack.c.l.b16 %v52
  %v181 = vunpack.c.h.b16 %v52
  %v182 = vunpack.c.l.b16 %v53
  %v183 = vunpack.c.l.b16 %v54
  %v184 = vunpack.c.h.b16 %v54
  %v185 = vunpack.c.l.b16 %v55
  %v186 = vunpack.c.l.b16 %v56
  %v187 = vunpack.c.h.b16 %v56
  %v188 = vunpack.c.l.b16 %v57
  %v189 = vunpack.c.l.b16 %v58
  %v190 = vunpack.c.h.b16 %v58
  %v191 = vunpack.c.l.b16 %v59
  %v192 = vunpack.c.l.b16 %v60
  %v193 = vunpack.c.h.b16 %v60
  %v194 = vunpack.c.l.b16 %v61
  %v195 = vunpack.c.l.b16 %v62
  %v196 = vunpack.c.h.b16 %v62
  %v197 = vunpack.c.l.b16 %v63
  %v198 = vunpack.c.l.b16 %v64
  %v199 = vunpack.c.h.b16 %v64
  %v200 = vunpack.c.l.b16 %v65
  %v201 = vunpack.c.l.b16 %v66
  %v202 = vunpack.c.h.b16 %v66
  %v203 = vunpack.c.l.b16 %v67
  %v204 = vpack.c.b16 %v183, %v180
  %v205 = vpack.c.b16 %v184, %v181
  %v206 = vpack.c.b16 %v185, %v182
  %v207 = vpack.c.b16 %v189, %v186
  %v208 = vpack.c.b16 %v190, %v187
  %v209 = vpack.c.b16 %v191, %v188
  %v210 = vpack.c.b16 %v195, %v192
  %v211 = vpack.c.b16 %v196, %v193
  %v212 = vpack.c.b16 %v197, %v194
  %v213 = vpack.c.b16 %v201, %v198
  %v214 = vpack.c.b16 %v202, %v199
  %v215 = vpack.c.b16 %v203, %v200
  %v324 = vunpack.c.l.b16 %v68
  %v325 = vunpack.c.h.b16 %v68
  %v326 = vunpack.c.l.b16 %v69
  %v327 = vunpack.c.l.b16 %v70
  %v328 = vunpack.c.h.b16 %v70
  %v329 = vunpack.c.l.b16 %v71
  %v330 = vunpack.c.l.b16 %v72
  %v331 = vunpack.c.h.b16 %v72
  %v332 = vunpack.c.l.b16 %v73
  %v333 = vunpack.c.l.b16 %v74
  %v334 = vunpack.c.h.b16 %v74
  %v335 = vunpack.c.l.b16 %v75
  %v336 = vunpack.c.l.b16 %v76
  %v337 = vunpack.c.h.b16 %v76
  %v338 = vunpack.c.l.b16 %v77
  %v339 = vunpack.c.l.b16 %v78
  %v340 = vunpack.c.h.b16 %v78
  %v341 = vunpack.c.l.b16 %v79
  %v342 = vunpack.c.l.b16 %v80
  %v343 = vunpack.c.h.b16 %v80
  %v344 = vunpack.c.l.b16 %v81
  %v345 = vunpack.c.l.b16 %v82
  %v346 = vunpack.c.h.b16 %v82
  %v347 = vunpack.c.l.b16 %v83
  %v348 = vunpack.c.l.b16 %v84
  %v349 = vunpack.c.h.b16 %v84
  %v350 = vunpack.c.l.b16 %v85
  %v351 = vunpack.c.l.b16 %v86
  %v352 = vunpack.c.h.b16 %v86
  %v353 = vunpack.c.l.b16 %v87
  %v354 = vunpack.c.l.b16 %v88
  %v355 = vunpack.c.h.b16 %v88
  %v356 = vunpack.c.l.b16 %v89
  %v357 = vunpack.c.l.b16 %v90
  %v358 = vunpack.c.h.b16 %v90
  %v359 = vunpack.c.l.b16 %v91
  %v360 = vunpack.c.l.b16 %v92
  %v361 = vunpack.c.h.b16 %v92
  %v362 = vunpack.c.l.b16 %v93
  %v363 = vunpack.c.l.b16 %v94
  %v364 = vunpack.c.h.b16 %v94
  %v365 = vunpack.c.l.b16 %v95
  %v366 = vunpack.c.l.b16 %v96
  %v367 = vunpack.c.h.b16 %v96
  %v368 = vunpack.c.l.b16 %v97
  %v369 = vunpack.c.l.b16 %v98
  %v370 = vunpack.c.h.b16 %v98
  %v371 = vunpack.c.l.b16 %v99
  %v372 = vunpack.c.l.b16 %v100
  %v373 = vunpack.c.h.b16 %v100
  %v374 = vunpack.c.l.b16 %v101
  %v375 = vunpack.c.l.b16 %v102
  %v376 = vunpack.c.h.b16 %v102
  %v377 = vunpack.c.l.b16 %v103
  %v378 = vunpack.c.l.b16 %v104
  %v379 = vunpack.c.h.b16 %v104
  %v380 = vunpack.c.l.b16 %v105
  %v381 = vunpack.c.l.b16 %v106
  %v382 = vunpack.c.h.b16 %v106
  %v383 = vunpack.c.l.b16 %v107
  %v384 = vunpack.c.l.b16 %v108
  %v385 = vunpack.c.h.b16 %v108
  %v386 = vunpack.c.l.b16 %v109
  %v387 = vunpack.c.l.b16 %v110
  %v388 = vunpack.c.h.b16 %v110
  %v389 = vunpack.c.l.b16 %v111
  %v390 = vunpack.c.l.b16 %v112
  %v391 = vunpack.c.h.b16 %v112
  %v392 = vunpack.c.l.b16 %v113
  %v393 = vunpack.c.l.b16 %v114
  %v394 = vunpack.c.h.b16 %v114
  %v395 = vunpack.c.l.b16 %v115
  %v396 = vunpack.c.l.b16 %v116
  %v397 = vunpack.c.h.b16 %v116
  %v398 = vunpack.c.l.b16 %v117
  %v399 = vunpack.c.l.b16 %v118
  %v400 = vunpack.c.h.b16 %v118
  %v401 = vunpack.c.l.b16 %v119
  %v402 = vunpack.c.l.b16 %v120
  %v403 = vunpack.c.h.b16 %v120
  %v404 = vunpack.c.l.b16 %v121
  %v405 = vunpack.c.l.b16 %v122
  %v406 = vunpack.c.h.b16 %v122
  %v407 = vunpack.c.l.b16 %v123
  %v408 = vunpack.c.l.b16 %v124
  %v409 = vunpack.c.h.b16 %v124
  %v410 = vunpack.c.l.b16 %v125
  %v411 = vunpack.c.l.b16 %v126
  %v412 = vunpack.c.h.b16 %v126
  %v413 = vunpack.c.l.b16 %v127
  %v414 = vunpack.c.l.b16 %v128
  %v415 = vunpack.c.h.b16 %v128
  %v416 = vunpack.c.l.b16 %v129
  %v417 = vunpack.c.l.b16 %v130
  %v418 = vunpack.c.h.b16 %v130
  %v419 = vunpack.c.l.b16 %v131
  %v420 = vunpack.c.l.b16 %v132
  %v421 = vunpack.c.h.b16 %v132
  %v422 = vunpack.c.l.b16 %v133
  %v423 = vunpack.c.l.b16 %v134
  %v424 = vunpack.c.h.b16 %v134
  %v425 = vunpack.c.l.b16 %v135
  %v426 = vunpack.c.l.b16 %v136
  %v427 = vunpack.c.h.b16 %v136
  %v428 = vunpack.c.l.b16 %v137
  %v429 = vunpack.c.l.b16 %v138
  %v430 = vunpack.c.h.b16 %v138
  %v431 = vunpack.c.l.b16 %v139
  %v432 = vunpack.c.l.b16 %v140
  %v433 = vunpack.c.h.b16 %v140
  %v434 = vunpack.c.l.b16 %v141
  %v435 = vunpack.c.l.b16 %v142
  %v436 = vunpack.c.h.b16 %v142
  %v437 = vunpack.c.l.b16 %v143
  %v438 = vunpack.c.l.b16 %v144
  %v439 = vunpack.c.h.b16 %v144
  %v440 = vunpack.c.l.b16 %v145
  %v441 = vunpack.c.l.b16 %v146
  %v442 = vunpack.c.h.b16 %v146
  %v443 = vunpack.c.l.b16 %v147
  %v444 = vunpack.c.l.b16 %v148
  %v445 = vunpack.c.h.b16 %v148
  %v446 = vunpack.c.l.b16 %v149
  %v447 = vunpack.c.l.b16 %v150
  %v448 = vunpack.c.h.b16 %v150
  %v449 = vunpack.c.l.b16 %v151
  %v450 = vunpack.c.l.b16 %v152
  %v451 = vunpack.c.h.b16 %v152
  %v452 = vunpack.c.l.b16 %v153
  %v453 = vunpack.c.l.b16 %v154
  %v454 = vunpack.c.h.b16 %v154
  %v455 = vunpack.c.l.b16 %v155
  %v456 = vunpack.c.l.b16 %v156
  %v457 = vunpack.c.h.b16 %v156
  %v458 = vunpack.c.l.b16 %v157
  %v459 = vunpack.c.l.b16 %v158
  %v460 = vunpack.c.h.b16 %v158
  %v461 = vunpack.c.l.b16 %v159
  %v462 = vunpack.c.l.b16 %v160
  %v463 = vunpack.c.h.b16 %v160
  %v464 = vunpack.c.l.b16 %v161
  %v465 = vunpack.c.l.b16 %v162
  %v466 = vunpack.c.h.b16 %v162
  %v467 = vunpack.c.l.b16 %v163
  %v468 = vpack.c.b16 %v327, %v324
  %v469 = vpack.c.b16 %v328, %v325
  %v470 = vpack.c.b16 %v329, %v326
  %v471 = vpack.c.b16 %v333, %v330
  %v472 = vpack.c.b16 %v334, %v331
  %v473 = vpack.c.b16 %v335, %v332
  %v474 = vpack.c.b16 %v339, %v336
  %v475 = vpack.c.b16 %v340, %v337
  %v476 = vpack.c.b16 %v341, %v338
  %v477 = vpack.c.b16 %v345, %v342
  %v478 = vpack.c.b16 %v346, %v343
  %v479 = vpack.c.b16 %v347, %v344
  %v480 = vpack.c.b16 %v351, %v348
  %v481 = vpack.c.b16 %v352, %v349
  %v482 = vpack.c.b16 %v353, %v350
  %v483 = vpack.c.b16 %v357, %v354
  %v484 = vpack.c.b16 %v358, %v355
  %v485 = vpack.c.b16 %v359, %v356
  %v486 = vpack.c.b16 %v363, %v360
  %v487 = vpack.c.b16 %v364, %v361
  %v488 = vpack.c.b16 %v365, %v362
  %v489 = vpack.c.b16 %v369, %v366
  %v490 = vpack.c.b16 %v370, %v367
  %v491 = vpack.c.b16 %v371, %v368
  %v492 = vpack.c.b16 %v375, %v372
  %v493 = vpack.c.b16 %v376, %v373
  %v494 = vpack.c.b16 %v377, %v374
  %v495 = vpack.c.b16 %v381, %v378
  %v496 = vpack.c.b16 %v382, %v379
  %v497 = vpack.c.b16 %v383, %v380
  %v498 = vpack.c.b16 %v387, %v384
  %v499 = vpack.c.b16 %v388, %v385
  %v500 = vpack.c.b16 %v389, %v386
  %v501 = vpack.c.b16 %v393, %v390
  %v502 = vpack.c.b16 %v394, %v391
  %v503 = vpack.c.b16 %v395, %v392
  %v504 = vpack.c.b16 %v399, %v396
  %v505 = vpack.c.b16 %v400, %v397
  %v506 = vpack.c.b16 %v401, %v398
  %v507 = vpack.c.b16 %v405, %v402
  %v508 = vpack.c.b16 %v406, %v403
  %v509 = vpack.c.b16 %v407, %v404
  %v510 = vpack.c.b16 %v411, %v408
  %v511 = vpack.c.b16 %v412, %v409
  %v512 = vpack.c.b16 %v413, %v410
  %v513 = vpack.c.b16 %v417, %v414
  %v514 = vpack.c.b16 %v418, %v415
  %v515 = vpack.c.b16 %v419, %v416
  %v516 = vpack.c.b16 %v423, %v420
  %v517 = vpack.c.b16 %v424, %v421
  %v518 = vpack.c.b16 %v425, %v422
  %v519 = vpack.c.b16 %v429, %v426
  %v520 = vpack.c.b16 %v430, %v427
  %v521 = vpack.c.b16 %v431, %v428
  %v522 = vpack.c.b16 %v435, %v432
  %v523 = vpack.c.b16 %v436, %v433
  %v524 = vpack.c.b16 %v437, %v434
  %v525 = vpack.c.b16 %v441, %v438
  %v526 = vpack.c.b16 %v442, %v439
  %v527 = vpack.c.b16 %v443, %v440
  %v528 = vpack.c.b16 %v447, %v444
  %v529 = vpack.c.b16 %v448, %v445
  %v530 = vpack.c.b16 %v449, %v446
  %v531 = vpack.c.b16 %v453, %v450
  %v532 = vpack.c.b16 %v454, %v451
  %v533 = vpack.c.b16 %v455, %v452
  %v534 = vpack.c.b16 %v459, %v456
  %v535 = vpack.c.b16 %v460, %v457
  %v536 = vpack.c.b16 %v461, %v458
  %v537 = vpack.c.b16 %v465, %v462
  %v538 = vpack.c.b16 %v466, %v463
  %v539 = vpack.c.b16 %v467, %v464
  %612 = vmatprep.subr.bf16.mxu0 %v469
  %613 = vmatpush1.bf16.msra.mxu0 %v468
  %614 = vmatprep.subr.bf16.mxu0 %v472
  %615 = vmatpush1.bf16.msra.mxu0 %v471
  %616 = vmatprep.subr.bf16.mxu0 %v475
  %617 = vmatpush1.bf16.msra.mxu0 %v474
  %618 = vmatprep.subr.bf16.mxu0 %v478
  %619 = vmatpush1.bf16.msra.mxu0 %v477
  %620 = vmatprep.subr.bf16.mxu0 %v481
  %621 = vmatpush1.bf16.msra.mxu0 %v480
  %622 = vmatprep.subr.bf16.mxu0 %v484
  %623 = vmatpush1.bf16.msra.mxu0 %v483
  %624 = vmatprep.subr.bf16.mxu0 %v487
  %625 = vmatpush1.bf16.msra.mxu0 %v486
  %626 = vmatprep.subr.bf16.mxu0 %v490
  %627 = vmatpush1.bf16.msra.mxu0 %v489
  %628 = vmatprep.subr.bf16.mxu0 %v493
  %629 = vmatpush1.bf16.msra.mxu0 %v492
  %630 = vmatprep.subr.bf16.mxu0 %v496
  %631 = vmatpush1.bf16.msra.mxu0 %v495
  %632 = vmatprep.subr.bf16.mxu0 %v499
  %633 = vmatpush1.bf16.msra.mxu0 %v498
  %634 = vmatprep.subr.bf16.mxu0 %v502
  %635 = vmatpush1.bf16.msra.mxu0 %v501
  %636 = vmatprep.subr.bf16.mxu0 %v505
  %637 = vmatpush1.bf16.msra.mxu0 %v504
  %638 = vmatprep.subr.bf16.mxu0 %v508
  %639 = vmatpush1.bf16.msra.mxu0 %v507
  %640 = vmatprep.subr.bf16.mxu0 %v511
  %641 = vmatpush1.bf16.msra.mxu0 %v510
  %642 = vmatprep.subr.bf16.mxu0 %v514
  %643 = vmatpush1.bf16.msra.mxu0 %v513
  %644 = vmatprep.mubr.bf16.mxu0 %v205
  %645 = vmatmul.mubr.bf16.gmra.mrb[0].mxu0 %v204
  %v646 = vpop.f32.mrb[0].mxu0
  %v647 = vadd.f32 0.0, %v646
  %v648 = vpop.f32.mrb[0].mxu0
  %v649 = vadd.f32 0.0, %v648
  %v650 = vpop.f32.mrb[0].mxu0
  %v651 = vadd.f32 0.0, %v650
  %v652 = vpop.f32.mrb[0].mxu0
  %v653 = vadd.f32 0.0, %v652
  %654 = vmatprep.mubr.bf16.mxu0 %v208
  %655 = vmatmul.mubr.bf16.gmra.mrb[0].mxu0 %v207
  %v656 = vpop.f32.mrb[0].mxu0
  %v657 = vadd.f32 0.0, %v656
  %v658 = vpop.f32.mrb[0].mxu0
  %v659 = vadd.f32 0.0, %v658
  %v660 = vpop.f32.mrb[0].mxu0
  %v661 = vadd.f32 0.0, %v660
  %v662 = vpop.f32.mrb[0].mxu0
  %v663 = vadd.f32 0.0, %v662
  %664 = vmatprep.mubr.bf16.mxu0 %v211
  %665 = vmatmul.mubr.bf16.gmra.mrb[0].mxu0 %v210
  %v666 = vpop.f32.mrb[0].mxu0
  %v667 = vadd.f32 0.0, %v666
  %v668 = vpop.f32.mrb[0].mxu0
  %v669 = vadd.f32 0.0, %v668
  %v670 = vpop.f32.mrb[0].mxu0
  %v671 = vadd.f32 0.0, %v670
  %v672 = vpop.f32.mrb[0].mxu0
  %v673 = vadd.f32 0.0, %v672
  %674 = vmatprep.mubr.bf16.mxu0 %v214
  %675 = vmatmul.mubr.bf16.gmra.mrb[0].mxu0 %v213
  %v676 = vpop.f32.mrb[0].mxu0
  %v677 = vadd.f32 0.0, %v676
  %v678 = vpop.f32.mrb[0].mxu0
  %v679 = vadd.f32 0.0, %v678
  %v680 = vpop.f32.mrb[0].mxu0
  %v681 = vadd.f32 0.0, %v680
  %v682 = vpop.f32.mrb[0].mxu0
  %v683 = vadd.f32 0.0, %v682
  %684 = vdwg.mxu0
  %685 = vmatprep.subr.bf16.mxu0 %v517
  %686 = vmatpush1.bf16.msra.mxu0 %v516
  %687 = vmatprep.subr.bf16.mxu0 %v520
  %688 = vmatpush1.bf16.msra.mxu0 %v519
  %689 = vmatprep.subr.bf16.mxu0 %v523
  %690 = vmatpush1.bf16.msra.mxu0 %v522
  %691 = vmatprep.subr.bf16.mxu0 %v526
  %692 = vmatpush1.bf16.msra.mxu0 %v525
  %693 = vmatprep.subr.bf16.mxu0 %v529
  %694 = vmatpush1.bf16.msra.mxu0 %v528
  %695 = vmatprep.subr.bf16.mxu0 %v532
  %696 = vmatpush1.bf16.msra.mxu0 %v531
  %697 = vmatprep.subr.bf16.mxu0 %v535
  %698 = vmatpush1.bf16.msra.mxu0 %v534
  %699 = vmatprep.subr.bf16.mxu0 %v538
  %700 = vmatpush1.bf16.msra.mxu0 %v537
  %701 = vmatprep.subr.bf16.mxu0 0
  %702 = vmatpush1.bf16.msra.mxu0 0
  %703 = vmatprep.subr.bf16.mxu0 0
  %704 = vmatpush1.bf16.msra.mxu0 0
  %705 = vmatprep.subr.bf16.mxu0 0
  %706 = vmatpush1.bf16.msra.mxu0 0
  %707 = vmatprep.subr.bf16.mxu0 0
  %708 = vmatpush1.bf16.msra.mxu0 0
  %709 = vmatprep.subr.bf16.mxu0 0
  %710 = vmatpush1.bf16.msra.mxu0 0
  %711 = vmatprep.subr.bf16.mxu0 0
  %712 = vmatpush1.bf16.msra.mxu0 0
  %713 = vmatprep.subr.bf16.mxu0 0
  %714 = vmatpush1.bf16.msra.mxu0 0
  %715 = vmatprep.subr.bf16.mxu0 0
  %716 = vmatpush1.bf16.msra.mxu0 0
  %717 = vmatprep.mubr.bf16.mxu0 0
  %718 = vmatmul.mubr.bf16.gmra.mrb[0].mxu0 %v206
  %v719 = vpop.f32.mrb[0].mxu0
  %v720 = vadd.f32 %v647, %v719
  %v721 = vpop.f32.mrb[0].mxu0
  %v722 = vadd.f32 %v649, %v721
  %v723 = vpop.f32.mrb[0].mxu0
  %v724 = vadd.f32 %v651, %v723
  %v725 = vpop.f32.mrb[0].mxu0
  %v726 = vadd.f32 %v653, %v725
  %727 = vmatprep.mubr.bf16.mxu0 0
  %728 = vmatmul.mubr.bf16.gmra.mrb[0].mxu0 %v209
  %v729 = vpop.f32.mrb[0].mxu0
  %v730 = vadd.f32 %v657, %v729
  %v731 = vpop.f32.mrb[0].mxu0
  %v732 = vadd.f32 %v659, %v731
  %v733 = vpop.f32.mrb[0].mxu0
  %v734 = vadd.f32 %v661, %v733
  %v735 = vpop.f32.mrb[0].mxu0
  %v736 = vadd.f32 %v663, %v735
  %737 = vmatprep.mubr.bf16.mxu0 0
  %738 = vmatmul.mubr.bf16.gmra.mrb[0].mxu0 %v212
  %v739 = vpop.f32.mrb[0].mxu0
  %v740 = vadd.f32 %v667, %v739
  %v741 = vpop.f32.mrb[0].mxu0
  %v742 = vadd.f32 %v669, %v741
  %v743 = vpop.f32.mrb[0].mxu0
  %v744 = vadd.f32 %v671, %v743
  %v745 = vpop.f32.mrb[0].mxu0
  %v746 = vadd.f32 %v673, %v745
  %747 = vmatprep.mubr.bf16.mxu0 0
  %748 = vmatmul.mubr.bf16.gmra.mrb[0].mxu0 %v215
  %v749 = vpop.f32.mrb[0].mxu0
  %v750 = vadd.f32 %v677, %v749
  %v751 = vpop.f32.mrb[0].mxu0
  %v752 = vadd.f32 %v679, %v751
  %v753 = vpop.f32.mrb[0].mxu0
  %v754 = vadd.f32 %v681, %v753
  %v755 = vpop.f32.mrb[0].mxu0
  %v756 = vadd.f32 %v683, %v755
  %757 = vdwg.mxu0
  %758 = vmatprep.subr.bf16.mxu0 0
  %759 = vmatpush1.bf16.msra.mxu0 %v470
  %760 = vmatprep.subr.bf16.mxu0 0
  %761 = vmatpush1.bf16.msra.mxu0 %v473
  %762 = vmatprep.subr.bf16.mxu0 0
  %763 = vmatpush1.bf16.msra.mxu0 %v476
  %764 = vmatprep.subr.bf16.mxu0 0
  %765 = vmatpush1.bf16.msra.mxu0 %v479
  %766 = vmatprep.subr.bf16.mxu0 0
  %767 = vmatpush1.bf16.msra.mxu0 %v482
  %768 = vmatprep.subr.bf16.mxu0 0
  %769 = vmatpush1.bf16.msra.mxu0 %v485
  %770 = vmatprep.subr.bf16.mxu0 0
  %771 = vmatpush1.bf16.msra.mxu0 %v488
  %772 = vmatprep.subr.bf16.mxu0 0
  %773 = vmatpush1.bf16.msra.mxu0 %v491
  %774 = vmatprep.subr.bf16.mxu0 0
  %775 = vmatpush1.bf16.msra.mxu0 %v494
  %776 = vmatprep.subr.bf16.mxu0 0
  %777 = vmatpush1.bf16.msra.mxu0 %v497
  %778 = vmatprep.subr.bf16.mxu0 0
  %779 = vmatpush1.bf16.msra.mxu0 %v500
  %780 = vmatprep.subr.bf16.mxu0 0
  %781 = vmatpush1.bf16.msra.mxu0 %v503
  %782 = vmatprep.subr.bf16.mxu0 0
  %783 = vmatpush1.bf16.msra.mxu0 %v506
  %784 = vmatprep.subr.bf16.mxu0 0
  %785 = vmatpush1.bf16.msra.mxu0 %v509
  %786 = vmatprep.subr.bf16.mxu0 0
  %787 = vmatpush1.bf16.msra.mxu0 %v512
  %788 = vmatprep.subr.bf16.mxu0 0
  %789 = vmatpush1.bf16.msra.mxu0 %v515
  %790 = vmatprep.mubr.bf16.mxu0 %v205
  %791 = vmatmul.mubr.bf16.gmra.mrb[0].mxu0 %v204
  %v792 = vpop.f32.mrb[0].mxu0
  %v793 = vadd.f32 0.0, %v792
  %v794 = vpop.f32.mrb[0].mxu0
  %v795 = vpop.f32.mrb[0].mxu0
  %v796 = vadd.f32 0.0, %v795
  %v797 = vpop.f32.mrb[0].mxu0
  %798 = vmatprep.mubr.bf16.mxu0 %v208
  %799 = vmatmul.mubr.bf16.gmra.mrb[0].mxu0 %v207
  %v800 = vpop.f32.mrb[0].mxu0
  %v801 = vadd.f32 0.0, %v800
  %v802 = vpop.f32.mrb[0].mxu0
  %v803 = vpop.f32.mrb[0].mxu0
  %v804 = vadd.f32 0.0, %v803
  %v805 = vpop.f32.mrb[0].mxu0
  %806 = vmatprep.mubr.bf16.mxu0 %v211
  %807 = vmatmul.mubr.bf16.gmra.mrb[0].mxu0 %v210
  %v808 = vpop.f32.mrb[0].mxu0
  %v809 = vadd.f32 0.0, %v808
  %v810 = vpop.f32.mrb[0].mxu0
  %v811 = vpop.f32.mrb[0].mxu0
  %v812 = vadd.f32 0.0, %v811
  %v813 = vpop.f32.mrb[0].mxu0
  %814 = vmatprep.mubr.bf16.mxu0 %v214
  %815 = vmatmul.mubr.bf16.gmra.mrb[0].mxu0 %v213
  %v816 = vpop.f32.mrb[0].mxu0
  %v817 = vadd.f32 0.0, %v816
  %v818 = vpop.f32.mrb[0].mxu0
  %v819 = vpop.f32.mrb[0].mxu0
  %v820 = vadd.f32 0.0, %v819
  %v821 = vpop.f32.mrb[0].mxu0
  %822 = vdwg.mxu0
  %823 = vmatprep.subr.bf16.mxu0 0
  %824 = vmatpush1.bf16.msra.mxu0 %v518
  %825 = vmatprep.subr.bf16.mxu0 0
  %826 = vmatpush1.bf16.msra.mxu0 %v521
  %827 = vmatprep.subr.bf16.mxu0 0
  %828 = vmatpush1.bf16.msra.mxu0 %v524
  %829 = vmatprep.subr.bf16.mxu0 0
  %830 = vmatpush1.bf16.msra.mxu0 %v527
  %831 = vmatprep.subr.bf16.mxu0 0
  %832 = vmatpush1.bf16.msra.mxu0 %v530
  %833 = vmatprep.subr.bf16.mxu0 0
  %834 = vmatpush1.bf16.msra.mxu0 %v533
  %835 = vmatprep.subr.bf16.mxu0 0
  %836 = vmatpush1.bf16.msra.mxu0 %v536
  %837 = vmatprep.subr.bf16.mxu0 0
  %838 = vmatpush1.bf16.msra.mxu0 %v539
  %839 = vmatprep.subr.bf16.mxu0 0
  %840 = vmatpush1.bf16.msra.mxu0 0
  %841 = vmatprep.subr.bf16.mxu0 0
  %842 = vmatpush1.bf16.msra.mxu0 0
  %843 = vmatprep.subr.bf16.mxu0 0
  %844 = vmatpush1.bf16.msra.mxu0 0
  %845 = vmatprep.subr.bf16.mxu0 0
  %846 = vmatpush1.bf16.msra.mxu0 0
  %847 = vmatprep.subr.bf16.mxu0 0
  %848 = vmatpush1.bf16.msra.mxu0 0
  %849 = vmatprep.subr.bf16.mxu0 0
  %850 = vmatpush1.bf16.msra.mxu0 0
  %851 = vmatprep.subr.bf16.mxu0 0
  %852 = vmatpush1.bf16.msra.mxu0 0
  %853 = vmatprep.subr.bf16.mxu0 0
  %854 = vmatpush1.bf16.msra.mxu0 0
  %855 = vmatprep.mubr.bf16.mxu0 0
  %856 = vmatmul.mubr.bf16.gmra.mrb[0].mxu0 %v206
  %v857 = vpop.f32.mrb[0].mxu0
  %v858 = vadd.f32 %v793, %v857
  %v859 = vpop.f32.mrb[0].mxu0
  %v860 = vpop.f32.mrb[0].mxu0
  %v861 = vadd.f32 %v796, %v860
  %v862 = vpop.f32.mrb[0].mxu0
  %863 = vmatprep.mubr.bf16.mxu0 0
  %864 = vmatmul.mubr.bf16.gmra.mrb[0].mxu0 %v209
  %v865 = vpop.f32.mrb[0].mxu0
  %v866 = vadd.f32 %v801, %v865
  %v867 = vpop.f32.mrb[0].mxu0
  %v868 = vpop.f32.mrb[0].mxu0
  %v869 = vadd.f32 %v804, %v868
  %v870 = vpop.f32.mrb[0].mxu0
  %871 = vmatprep.mubr.bf16.mxu0 0
  %872 = vmatmul.mubr.bf16.gmra.mrb[0].mxu0 %v212
  %v873 = vpop.f32.mrb[0].mxu0
  %v874 = vadd.f32 %v809, %v873
  %v875 = vpop.f32.mrb[0].mxu0
  %v876 = vpop.f32.mrb[0].mxu0
  %v877 = vadd.f32 %v812, %v876
  %v878 = vpop.f32.mrb[0].mxu0
  %879 = vmatprep.mubr.bf16.mxu0 0
  %880 = vmatmul.mubr.bf16.gmra.mrb[0].mxu0 %v215
  %v881 = vpop.f32.mrb[0].mxu0
  %v882 = vadd.f32 %v817, %v881
  %v883 = vpop.f32.mrb[0].mxu0
  %v884 = vpop.f32.mrb[0].mxu0
  %v885 = vadd.f32 %v820, %v884
  %v886 = vpop.f32.mrb[0].mxu0
  %887 = vdwg.mxu0
  %v888 = vrot.slane %v720, 7
  %v889 = vrot.slane %v724, 7
  %v890 = vrot.slane %v730, 7
  %v891 = vrot.slane %v734, 7
  %v892 = vrot.slane %v740, 7
  %v893 = vrot.slane %v744, 7
  %v894 = vrot.slane %v750, 7
  %v895 = vrot.slane %v754, 7
  %v896 = vlaneseq
  %v897 = vshrl.u32 %v896, 7
  %vm898 = vcmp.lt.s32.totalorder %v897, 1
  %v899 = vsel %vm898, %v894, %v895
  %v900 = vsel %vm898, %v893, %v894
  %v901 = vsel %vm898, %v892, %v893
  %v902 = vsel %vm898, %v891, %v892
  %v903 = vsel %vm898, %v890, %v891
  %v904 = vsel %vm898, %v889, %v890
  %v905 = vsel %vm898, %v888, %v889
  %v906 = vsel %vm898, %v895, %v888
  %908 = vset.pattern.permute.xlu0 0
  %909 = vperm.xlu0 %908, %v35
  %v910 = vpop.permute.xlu0 %909
  %913 = vset.pattern.permute.xlu0 0
  %914 = vperm.xlu0 %913, %v36
  %v915 = vpop.permute.xlu0 %914
  %918 = vset.pattern.permute.xlu0 0
  %919 = vperm.xlu0 %918, %v37
  %v920 = vpop.permute.xlu0 %919
  %923 = vset.pattern.permute.xlu0 0
  %924 = vperm.xlu0 %923, %v38
  %v925 = vpop.permute.xlu0 %924
  %928 = vset.pattern.permute.xlu0 0
  %929 = vperm.xlu0 %928, %v39
  %v930 = vpop.permute.xlu0 %929
  %933 = vset.pattern.permute.xlu0 0
  %934 = vperm.xlu0 %933, %v40
  %v935 = vpop.permute.xlu0 %934
  %938 = vset.pattern.permute.xlu0 0
  %939 = vperm.xlu0 %938, %v41
  %v940 = vpop.permute.xlu0 %939
  %943 = vset.pattern.permute.xlu0 0
  %944 = vperm.xlu0 %943, %v42
  %v945 = vpop.permute.xlu0 %944
  %v947 = vmul.f32 %v899, %v910
  %v948 = vmul.f32 %v906, %v915
  %v949 = vmul.f32 %v905, %v920
  %v950 = vmul.f32 %v904, %v925
  %v951 = vmul.f32 %v903, %v930
  %v952 = vmul.f32 %v902, %v935
  %v953 = vmul.f32 %v901, %v940
  %v954 = vmul.f32 %v900, %v945
  %v955 = vadd.f32 %v947, 0.0
  %v956 = vadd.f32 %v948, 0.0
  %v957 = vadd.f32 %v949, 0.0
  %v958 = vadd.f32 %v950, 0.0
  %v959 = vadd.f32 %v951, 0.0
  %v960 = vadd.f32 %v952, 0.0
  %v961 = vadd.f32 %v953, 0.0
  %v962 = vadd.f32 %v954, 0.0
  %971 = vrot.lane.b32.xlu0 %v720, 96
  %v972 = vpop.permute.xlu0 %971
  %973 = vrot.lane.b32.xlu0 %v724, 96
  %v974 = vpop.permute.xlu0 %973
  %975 = vrot.lane.b32.xlu0 %v730, 96
  %v976 = vpop.permute.xlu0 %975
  %977 = vrot.lane.b32.xlu0 %v734, 96
  %v978 = vpop.permute.xlu0 %977
  %979 = vrot.lane.b32.xlu0 %v740, 96
  %v980 = vpop.permute.xlu0 %979
  %981 = vrot.lane.b32.xlu0 %v744, 96
  %v982 = vpop.permute.xlu0 %981
  %983 = vrot.lane.b32.xlu0 %v750, 96
  %v984 = vpop.permute.xlu0 %983
  %985 = vrot.lane.b32.xlu0 %v754, 96
  %v986 = vpop.permute.xlu0 %985
  %995 = vset.pattern.permute.xlu0 1
  %996 = vperm.xlu0 %995, %v35
  %v997 = vpop.permute.xlu0 %996
  %999 = vset.pattern.permute.xlu0 1
  %1000 = vperm.xlu0 %999, %v36
  %v1001 = vpop.permute.xlu0 %1000
  %1003 = vset.pattern.permute.xlu0 1
  %1004 = vperm.xlu0 %1003, %v37
  %v1005 = vpop.permute.xlu0 %1004
  %1007 = vset.pattern.permute.xlu0 1
  %1008 = vperm.xlu0 %1007, %v38
  %v1009 = vpop.permute.xlu0 %1008
  %1011 = vset.pattern.permute.xlu0 1
  %1012 = vperm.xlu0 %1011, %v39
  %v1013 = vpop.permute.xlu0 %1012
  %1015 = vset.pattern.permute.xlu0 1
  %1016 = vperm.xlu0 %1015, %v40
  %v1017 = vpop.permute.xlu0 %1016
  %1019 = vset.pattern.permute.xlu0 1
  %1020 = vperm.xlu0 %1019, %v41
  %v1021 = vpop.permute.xlu0 %1020
  %1023 = vset.pattern.permute.xlu0 1
  %1024 = vperm.xlu0 %1023, %v42
  %v1025 = vpop.permute.xlu0 %1024
  %v1027 = vmul.f32 %v986, %v997
  %v1028 = vmul.f32 %v972, %v1001
  %v1029 = vmul.f32 %v974, %v1005
  %v1030 = vmul.f32 %v976, %v1009
  %v1031 = vmul.f32 %v978, %v1013
  %v1032 = vmul.f32 %v980, %v1017
  %v1033 = vmul.f32 %v982, %v1021
  %v1034 = vmul.f32 %v984, %v1025
  %v1035 = vadd.f32 %v955, %v1027
  %v1036 = vadd.f32 %v956, %v1028
  %v1037 = vadd.f32 %v957, %v1029
  %v1038 = vadd.f32 %v958, %v1030
  %v1039 = vadd.f32 %v959, %v1031
  %v1040 = vadd.f32 %v960, %v1032
  %v1041 = vadd.f32 %v961, %v1033
  %v1042 = vadd.f32 %v962, %v1034
  %1043 = vrot.lane.b32.xlu0 %v720, 64
  %v1044 = vpop.permute.xlu0 %1043
  %1045 = vrot.lane.b32.xlu0 %v724, 64
  %v1046 = vpop.permute.xlu0 %1045
  %1047 = vrot.lane.b32.xlu0 %v730, 64
  %v1048 = vpop.permute.xlu0 %1047
  %1049 = vrot.lane.b32.xlu0 %v734, 64
  %v1050 = vpop.permute.xlu0 %1049
  %1051 = vrot.lane.b32.xlu0 %v740, 64
  %v1052 = vpop.permute.xlu0 %1051
  %1053 = vrot.lane.b32.xlu0 %v744, 64
  %v1054 = vpop.permute.xlu0 %1053
  %1055 = vrot.lane.b32.xlu0 %v750, 64
  %v1056 = vpop.permute.xlu0 %1055
  %1057 = vrot.lane.b32.xlu0 %v754, 64
  %v1058 = vpop.permute.xlu0 %1057
  %v1067 = vrot.slane %v1044, 1
  %v1068 = vrot.slane %v1046, 1
  %v1069 = vrot.slane %v1048, 1
  %v1070 = vrot.slane %v1050, 1
  %v1071 = vrot.slane %v1052, 1
  %v1072 = vrot.slane %v1054, 1
  %v1073 = vrot.slane %v1056, 1
  %v1074 = vrot.slane %v1058, 1
  %vm1075 = vcmp.lt.s32.totalorder %v897, 7
  %v1076 = vsel %vm1075, %v1073, %v1074
  %v1077 = vsel %vm1075, %v1072, %v1073
  %v1078 = vsel %vm1075, %v1071, %v1072
  %v1079 = vsel %vm1075, %v1070, %v1071
  %v1080 = vsel %vm1075, %v1069, %v1070
  %v1081 = vsel %vm1075, %v1068, %v1069
  %v1082 = vsel %vm1075, %v1067, %v1068
  %v1083 = vsel %vm1075, %v1074, %v1067
  %1084 = vset.pattern.permute.xlu0 2
  %1085 = vperm.xlu0 %1084, %v35
  %v1086 = vpop.permute.xlu0 %1085
  %1088 = vset.pattern.permute.xlu0 2
  %1089 = vperm.xlu0 %1088, %v36
  %v1090 = vpop.permute.xlu0 %1089
  %1092 = vset.pattern.permute.xlu0 2
  %1093 = vperm.xlu0 %1092, %v37
  %v1094 = vpop.permute.xlu0 %1093
  %1096 = vset.pattern.permute.xlu0 2
  %1097 = vperm.xlu0 %1096, %v38
  %v1098 = vpop.permute.xlu0 %1097
  %1100 = vset.pattern.permute.xlu0 2
  %1101 = vperm.xlu0 %1100, %v39
  %v1102 = vpop.permute.xlu0 %1101
  %1104 = vset.pattern.permute.xlu0 2
  %1105 = vperm.xlu0 %1104, %v40
  %v1106 = vpop.permute.xlu0 %1105
  %1108 = vset.pattern.permute.xlu0 2
  %1109 = vperm.xlu0 %1108, %v41
  %v1110 = vpop.permute.xlu0 %1109
  %1112 = vset.pattern.permute.xlu0 2
  %1113 = vperm.xlu0 %1112, %v42
  %v1114 = vpop.permute.xlu0 %1113
  %v1116 = vmul.f32 %v1083, %v1086
  %v1117 = vmul.f32 %v1082, %v1090
  %v1118 = vmul.f32 %v1081, %v1094
  %v1119 = vmul.f32 %v1080, %v1098
  %v1120 = vmul.f32 %v1079, %v1102
  %v1121 = vmul.f32 %v1078, %v1106
  %v1122 = vmul.f32 %v1077, %v1110
  %v1123 = vmul.f32 %v1076, %v1114
  %v1124 = vadd.f32 %v1035, %v1116
  %v1125 = vadd.f32 %v1036, %v1117
  %v1126 = vadd.f32 %v1037, %v1118
  %v1127 = vadd.f32 %v1038, %v1119
  %v1128 = vadd.f32 %v1039, %v1120
  %v1129 = vadd.f32 %v1040, %v1121
  %v1130 = vadd.f32 %v1041, %v1122
  %v1131 = vadd.f32 %v1042, %v1123
  %1132 = vrot.lane.b32.xlu0 %v720, 32
  %v1133 = vpop.permute.xlu0 %1132
  %1134 = vrot.lane.b32.xlu0 %v724, 32
  %v1135 = vpop.permute.xlu0 %1134
  %1136 = vrot.lane.b32.xlu0 %v730, 32
  %v1137 = vpop.permute.xlu0 %1136
  %1138 = vrot.lane.b32.xlu0 %v734, 32
  %v1139 = vpop.permute.xlu0 %1138
  %1140 = vrot.lane.b32.xlu0 %v740, 32
  %v1141 = vpop.permute.xlu0 %1140
  %1142 = vrot.lane.b32.xlu0 %v744, 32
  %v1143 = vpop.permute.xlu0 %1142
  %1144 = vrot.lane.b32.xlu0 %v750, 32
  %v1145 = vpop.permute.xlu0 %1144
  %1146 = vrot.lane.b32.xlu0 %v754, 32
  %v1147 = vpop.permute.xlu0 %1146
  %v1156 = vrot.slane %v1133, 7
  %v1157 = vrot.slane %v1135, 7
  %v1158 = vrot.slane %v1137, 7
  %v1159 = vrot.slane %v1139, 7
  %v1160 = vrot.slane %v1141, 7
  %v1161 = vrot.slane %v1143, 7
  %v1162 = vrot.slane %v1145, 7
  %v1163 = vrot.slane %v1147, 7
  %v1164 = vsel %vm898, %v1162, %v1163
  %v1165 = vsel %vm898, %v1161, %v1162
  %v1166 = vsel %vm898, %v1160, %v1161
  %v1167 = vsel %vm898, %v1159, %v1160
  %v1168 = vsel %vm898, %v1158, %v1159
  %v1169 = vsel %vm898, %v1157, %v1158
  %v1170 = vsel %vm898, %v1156, %v1157
  %v1171 = vsel %vm898, %v1163, %v1156
  %1172 = vset.pattern.permute.xlu0 3
  %1173 = vperm.xlu0 %1172, %v35
  %v1174 = vpop.permute.xlu0 %1173
  %1176 = vset.pattern.permute.xlu0 3
  %1177 = vperm.xlu0 %1176, %v36
  %v1178 = vpop.permute.xlu0 %1177
  %1180 = vset.pattern.permute.xlu0 3
  %1181 = vperm.xlu0 %1180, %v37
  %v1182 = vpop.permute.xlu0 %1181
  %1184 = vset.pattern.permute.xlu0 3
  %1185 = vperm.xlu0 %1184, %v38
  %v1186 = vpop.permute.xlu0 %1185
  %1188 = vset.pattern.permute.xlu0 3
  %1189 = vperm.xlu0 %1188, %v39
  %v1190 = vpop.permute.xlu0 %1189
  %1192 = vset.pattern.permute.xlu0 3
  %1193 = vperm.xlu0 %1192, %v40
  %v1194 = vpop.permute.xlu0 %1193
  %1196 = vset.pattern.permute.xlu0 3
  %1197 = vperm.xlu0 %1196, %v41
  %v1198 = vpop.permute.xlu0 %1197
  %1200 = vset.pattern.permute.xlu0 3
  %1201 = vperm.xlu0 %1200, %v42
  %v1202 = vpop.permute.xlu0 %1201
  %v1204 = vmul.f32 %v1171, %v1174
  %v1205 = vmul.f32 %v1170, %v1178
  %v1206 = vmul.f32 %v1169, %v1182
  %v1207 = vmul.f32 %v1168, %v1186
  %v1208 = vmul.f32 %v1167, %v1190
  %v1209 = vmul.f32 %v1166, %v1194
  %v1210 = vmul.f32 %v1165, %v1198
  %v1211 = vmul.f32 %v1164, %v1202
  %v1212 = vadd.f32 %v1124, %v1204
  %v1213 = vadd.f32 %v1125, %v1205
  %v1214 = vadd.f32 %v1126, %v1206
  %v1215 = vadd.f32 %v1127, %v1207
  %v1216 = vadd.f32 %v1128, %v1208
  %v1217 = vadd.f32 %v1129, %v1209
  %v1218 = vadd.f32 %v1130, %v1210
  %v1219 = vadd.f32 %v1131, %v1211
  %1220 = vset.pattern.permute.xlu0 4
  %1221 = vperm.xlu0 %1220, %v35
  %v1222 = vpop.permute.xlu0 %1221
  %1224 = vset.pattern.permute.xlu0 4
  %1225 = vperm.xlu0 %1224, %v36
  %v1226 = vpop.permute.xlu0 %1225
  %1228 = vset.pattern.permute.xlu0 4
  %1229 = vperm.xlu0 %1228, %v37
  %v1230 = vpop.permute.xlu0 %1229
  %1232 = vset.pattern.permute.xlu0 4
  %1233 = vperm.xlu0 %1232, %v38
  %v1234 = vpop.permute.xlu0 %1233
  %1236 = vset.pattern.permute.xlu0 4
  %1237 = vperm.xlu0 %1236, %v39
  %v1238 = vpop.permute.xlu0 %1237
  %1240 = vset.pattern.permute.xlu0 4
  %1241 = vperm.xlu0 %1240, %v40
  %v1242 = vpop.permute.xlu0 %1241
  %1244 = vset.pattern.permute.xlu0 4
  %1245 = vperm.xlu0 %1244, %v41
  %v1246 = vpop.permute.xlu0 %1245
  %1248 = vset.pattern.permute.xlu0 4
  %1249 = vperm.xlu0 %1248, %v42
  %v1250 = vpop.permute.xlu0 %1249
  %v1252 = vmul.f32 %v722, %v1222
  %v1253 = vmul.f32 %v726, %v1226
  %v1254 = vmul.f32 %v732, %v1230
  %v1255 = vmul.f32 %v736, %v1234
  %v1256 = vmul.f32 %v742, %v1238
  %v1257 = vmul.f32 %v746, %v1242
  %v1258 = vmul.f32 %v752, %v1246
  %v1259 = vmul.f32 %v756, %v1250
  %v1260 = vadd.f32 %v1212, %v1252
  %v1261 = vadd.f32 %v1213, %v1253
  %v1262 = vadd.f32 %v1214, %v1254
  %v1263 = vadd.f32 %v1215, %v1255
  %v1264 = vadd.f32 %v1216, %v1256
  %v1265 = vadd.f32 %v1217, %v1257
  %v1266 = vadd.f32 %v1218, %v1258
  %v1267 = vadd.f32 %v1219, %v1259
  %1276 = vrot.lane.b32.xlu0 %v722, 96
  %v1277 = vpop.permute.xlu0 %1276
  %1278 = vrot.lane.b32.xlu0 %v726, 96
  %v1279 = vpop.permute.xlu0 %1278
  %1280 = vrot.lane.b32.xlu0 %v732, 96
  %v1281 = vpop.permute.xlu0 %1280
  %1282 = vrot.lane.b32.xlu0 %v736, 96
  %v1283 = vpop.permute.xlu0 %1282
  %1284 = vrot.lane.b32.xlu0 %v742, 96
  %v1285 = vpop.permute.xlu0 %1284
  %1286 = vrot.lane.b32.xlu0 %v746, 96
  %v1287 = vpop.permute.xlu0 %1286
  %1288 = vrot.lane.b32.xlu0 %v752, 96
  %v1289 = vpop.permute.xlu0 %1288
  %1290 = vrot.lane.b32.xlu0 %v756, 96
  %v1291 = vpop.permute.xlu0 %1290
  %v1300 = vrot.slane %v1277, 1
  %v1301 = vrot.slane %v1279, 1
  %v1302 = vrot.slane %v1281, 1
  %v1303 = vrot.slane %v1283, 1
  %v1304 = vrot.slane %v1285, 1
  %v1305 = vrot.slane %v1287, 1
  %v1306 = vrot.slane %v1289, 1
  %v1307 = vrot.slane %v1291, 1
  %v1308 = vsel %vm1075, %v1306, %v1307
  %v1309 = vsel %vm1075, %v1305, %v1306
  %v1310 = vsel %vm1075, %v1304, %v1305
  %v1311 = vsel %vm1075, %v1303, %v1304
  %v1312 = vsel %vm1075, %v1302, %v1303
  %v1313 = vsel %vm1075, %v1301, %v1302
  %v1314 = vsel %vm1075, %v1300, %v1301
  %v1315 = vsel %vm1075, %v1307, %v1300
  %1316 = vset.pattern.permute.xlu0 5
  %1317 = vperm.xlu0 %1316, %v35
  %v1318 = vpop.permute.xlu0 %1317
  %1320 = vset.pattern.permute.xlu0 5
  %1321 = vperm.xlu0 %1320, %v36
  %v1322 = vpop.permute.xlu0 %1321
  %1324 = vset.pattern.permute.xlu0 5
  %1325 = vperm.xlu0 %1324, %v37
  %v1326 = vpop.permute.xlu0 %1325
  %1328 = vset.pattern.permute.xlu0 5
  %1329 = vperm.xlu0 %1328, %v38
  %v1330 = vpop.permute.xlu0 %1329
  %1332 = vset.pattern.permute.xlu0 5
  %1333 = vperm.xlu0 %1332, %v39
  %v1334 = vpop.permute.xlu0 %1333
  %1336 = vset.pattern.permute.xlu0 5
  %1337 = vperm.xlu0 %1336, %v40
  %v1338 = vpop.permute.xlu0 %1337
  %1340 = vset.pattern.permute.xlu0 5
  %1341 = vperm.xlu0 %1340, %v41
  %v1342 = vpop.permute.xlu0 %1341
  %1344 = vset.pattern.permute.xlu0 5
  %1345 = vperm.xlu0 %1344, %v42
  %v1346 = vpop.permute.xlu0 %1345
  %v1348 = vmul.f32 %v1314, %v1318
  %v1349 = vmul.f32 %v1313, %v1322
  %v1350 = vmul.f32 %v1312, %v1326
  %v1351 = vmul.f32 %v1311, %v1330
  %v1352 = vmul.f32 %v1310, %v1334
  %v1353 = vmul.f32 %v1309, %v1338
  %v1354 = vmul.f32 %v1308, %v1342
  %v1355 = vmul.f32 %v1315, %v1346
  %v1356 = vadd.f32 %v1260, %v1348
  %v1357 = vadd.f32 %v1261, %v1349
  %v1358 = vadd.f32 %v1262, %v1350
  %v1359 = vadd.f32 %v1263, %v1351
  %v1360 = vadd.f32 %v1264, %v1352
  %v1361 = vadd.f32 %v1265, %v1353
  %v1362 = vadd.f32 %v1266, %v1354
  %v1363 = vadd.f32 %v1267, %v1355
  %1364 = vrot.lane.b32.xlu0 %v722, 64
  %v1365 = vpop.permute.xlu0 %1364
  %1366 = vrot.lane.b32.xlu0 %v726, 64
  %v1367 = vpop.permute.xlu0 %1366
  %1368 = vrot.lane.b32.xlu0 %v732, 64
  %v1369 = vpop.permute.xlu0 %1368
  %1370 = vrot.lane.b32.xlu0 %v736, 64
  %v1371 = vpop.permute.xlu0 %1370
  %1372 = vrot.lane.b32.xlu0 %v742, 64
  %v1373 = vpop.permute.xlu0 %1372
  %1374 = vrot.lane.b32.xlu0 %v746, 64
  %v1375 = vpop.permute.xlu0 %1374
  %1376 = vrot.lane.b32.xlu0 %v752, 64
  %v1377 = vpop.permute.xlu0 %1376
  %1378 = vrot.lane.b32.xlu0 %v756, 64
  %v1379 = vpop.permute.xlu0 %1378
  %v1388 = vrot.slane %v1365, 7
  %v1389 = vrot.slane %v1367, 7
  %v1390 = vrot.slane %v1369, 7
  %v1391 = vrot.slane %v1371, 7
  %v1392 = vrot.slane %v1373, 7
  %v1393 = vrot.slane %v1375, 7
  %v1394 = vrot.slane %v1377, 7
  %v1395 = vrot.slane %v1379, 7
  %v1396 = vsel %vm898, %v1394, %v1395
  %v1397 = vsel %vm898, %v1393, %v1394
  %v1398 = vsel %vm898, %v1392, %v1393
  %v1399 = vsel %vm898, %v1391, %v1392
  %v1400 = vsel %vm898, %v1390, %v1391
  %v1401 = vsel %vm898, %v1389, %v1390
  %v1402 = vsel %vm898, %v1388, %v1389
  %v1403 = vsel %vm898, %v1395, %v1388
  %1404 = vset.pattern.permute.xlu0 6
  %1405 = vperm.xlu0 %1404, %v35
  %v1406 = vpop.permute.xlu0 %1405
  %1408 = vset.pattern.permute.xlu0 6
  %1409 = vperm.xlu0 %1408, %v36
  %v1410 = vpop.permute.xlu0 %1409
  %1412 = vset.pattern.permute.xlu0 6
  %1413 = vperm.xlu0 %1412, %v37
  %v1414 = vpop.permute.xlu0 %1413
  %1416 = vset.pattern.permute.xlu0 6
  %1417 = vperm.xlu0 %1416, %v38
  %v1418 = vpop.permute.xlu0 %1417
  %1420 = vset.pattern.permute.xlu0 6
  %1421 = vperm.xlu0 %1420, %v39
  %v1422 = vpop.permute.xlu0 %1421
  %1424 = vset.pattern.permute.xlu0 6
  %1425 = vperm.xlu0 %1424, %v40
  %v1426 = vpop.permute.xlu0 %1425
  %1428 = vset.pattern.permute.xlu0 6
  %1429 = vperm.xlu0 %1428, %v41
  %v1430 = vpop.permute.xlu0 %1429
  %1432 = vset.pattern.permute.xlu0 6
  %1433 = vperm.xlu0 %1432, %v42
  %v1434 = vpop.permute.xlu0 %1433
  %v1436 = vmul.f32 %v1402, %v1406
  %v1437 = vmul.f32 %v1401, %v1410
  %v1438 = vmul.f32 %v1400, %v1414
  %v1439 = vmul.f32 %v1399, %v1418
  %v1440 = vmul.f32 %v1398, %v1422
  %v1441 = vmul.f32 %v1397, %v1426
  %v1442 = vmul.f32 %v1396, %v1430
  %v1443 = vmul.f32 %v1403, %v1434
  %v1444 = vadd.f32 %v1356, %v1436
  %v1445 = vadd.f32 %v1357, %v1437
  %v1446 = vadd.f32 %v1358, %v1438
  %v1447 = vadd.f32 %v1359, %v1439
  %v1448 = vadd.f32 %v1360, %v1440
  %v1449 = vadd.f32 %v1361, %v1441
  %v1450 = vadd.f32 %v1362, %v1442
  %v1451 = vadd.f32 %v1363, %v1443
  %1452 = vrot.lane.b32.xlu0 %v722, 32
  %v1453 = vpop.permute.xlu0 %1452
  %1454 = vrot.lane.b32.xlu0 %v726, 32
  %v1455 = vpop.permute.xlu0 %1454
  %1456 = vrot.lane.b32.xlu0 %v732, 32
  %v1457 = vpop.permute.xlu0 %1456
  %1458 = vrot.lane.b32.xlu0 %v736, 32
  %v1459 = vpop.permute.xlu0 %1458
  %1460 = vrot.lane.b32.xlu0 %v742, 32
  %v1461 = vpop.permute.xlu0 %1460
  %1462 = vrot.lane.b32.xlu0 %v746, 32
  %v1463 = vpop.permute.xlu0 %1462
  %1464 = vrot.lane.b32.xlu0 %v752, 32
  %v1465 = vpop.permute.xlu0 %1464
  %1466 = vrot.lane.b32.xlu0 %v756, 32
  %v1467 = vpop.permute.xlu0 %1466
  %1476 = vset.pattern.permute.xlu0 7
  %1477 = vperm.xlu0 %1476, %v35
  %v1478 = vpop.permute.xlu0 %1477
  %1480 = vset.pattern.permute.xlu0 7
  %1481 = vperm.xlu0 %1480, %v36
  %v1482 = vpop.permute.xlu0 %1481
  %1484 = vset.pattern.permute.xlu0 7
  %1485 = vperm.xlu0 %1484, %v37
  %v1486 = vpop.permute.xlu0 %1485
  %1488 = vset.pattern.permute.xlu0 7
  %1489 = vperm.xlu0 %1488, %v38
  %v1490 = vpop.permute.xlu0 %1489
  %1492 = vset.pattern.permute.xlu0 7
  %1493 = vperm.xlu0 %1492, %v39
  %v1494 = vpop.permute.xlu0 %1493
  %1496 = vset.pattern.permute.xlu0 7
  %1497 = vperm.xlu0 %1496, %v40
  %v1498 = vpop.permute.xlu0 %1497
  %1500 = vset.pattern.permute.xlu0 7
  %1501 = vperm.xlu0 %1500, %v41
  %v1502 = vpop.permute.xlu0 %1501
  %1504 = vset.pattern.permute.xlu0 7
  %1505 = vperm.xlu0 %1504, %v42
  %v1506 = vpop.permute.xlu0 %1505
  %v1508 = vmul.f32 %v1455, %v1478
  %v1509 = vmul.f32 %v1457, %v1482
  %v1510 = vmul.f32 %v1459, %v1486
  %v1511 = vmul.f32 %v1461, %v1490
  %v1512 = vmul.f32 %v1463, %v1494
  %v1513 = vmul.f32 %v1465, %v1498
  %v1514 = vmul.f32 %v1467, %v1502
  %v1515 = vmul.f32 %v1453, %v1506
  %v1516 = vadd.f32 %v1444, %v1508
  %v1517 = vadd.f32 %v1445, %v1509
  %v1518 = vadd.f32 %v1446, %v1510
  %v1519 = vadd.f32 %v1447, %v1511
  %v1520 = vadd.f32 %v1448, %v1512
  %v1521 = vadd.f32 %v1449, %v1513
  %v1522 = vadd.f32 %v1450, %v1514
  %v1523 = vadd.f32 %v1451, %v1515
  %v1524 = vrot.slane %v858, 1
  %v1525 = vrot.slane %v861, 1
  %v1526 = vrot.slane %v866, 1
  %v1527 = vrot.slane %v869, 1
  %v1528 = vrot.slane %v874, 1
  %v1529 = vrot.slane %v877, 1
  %v1530 = vrot.slane %v882, 1
  %v1531 = vrot.slane %v885, 1
  %v1532 = vsel %vm1075, %v1530, %v1531
  %v1533 = vsel %vm1075, %v1529, %v1530
  %v1534 = vsel %vm1075, %v1528, %v1529
  %v1535 = vsel %vm1075, %v1527, %v1528
  %v1536 = vsel %vm1075, %v1526, %v1527
  %v1537 = vsel %vm1075, %v1525, %v1526
  %v1538 = vsel %vm1075, %v1524, %v1525
  %v1539 = vsel %vm1075, %v1531, %v1524
  %1540 = vset.pattern.permute.xlu0 8
  %1541 = vperm.xlu0 %1540, %v35
  %v1542 = vpop.permute.xlu0 %1541
  %1544 = vset.pattern.permute.xlu0 8
  %1545 = vperm.xlu0 %1544, %v36
  %v1546 = vpop.permute.xlu0 %1545
  %1548 = vset.pattern.permute.xlu0 8
  %1549 = vperm.xlu0 %1548, %v37
  %v1550 = vpop.permute.xlu0 %1549
  %1552 = vset.pattern.permute.xlu0 8
  %1553 = vperm.xlu0 %1552, %v38
  %v1554 = vpop.permute.xlu0 %1553
  %1556 = vset.pattern.permute.xlu0 8
  %1557 = vperm.xlu0 %1556, %v39
  %v1558 = vpop.permute.xlu0 %1557
  %1560 = vset.pattern.permute.xlu0 8
  %1561 = vperm.xlu0 %1560, %v40
  %v1562 = vpop.permute.xlu0 %1561
  %1564 = vset.pattern.permute.xlu0 8
  %1565 = vperm.xlu0 %1564, %v41
  %v1566 = vpop.permute.xlu0 %1565
  %1568 = vset.pattern.permute.xlu0 8
  %1569 = vperm.xlu0 %1568, %v42
  %v1570 = vpop.permute.xlu0 %1569
  %v1572 = vmul.f32 %v1537, %v1542
  %v1573 = vmul.f32 %v1536, %v1546
  %v1574 = vmul.f32 %v1535, %v1550
  %v1575 = vmul.f32 %v1534, %v1554
  %v1576 = vmul.f32 %v1533, %v1558
  %v1577 = vmul.f32 %v1532, %v1562
  %v1578 = vmul.f32 %v1539, %v1566
  %v1579 = vmul.f32 %v1538, %v1570
  %v1580 = vadd.f32 %v1516, %v1572
  %v1581 = vadd.f32 %v1517, %v1573
  %v1582 = vadd.f32 %v1518, %v1574
  %v1583 = vadd.f32 %v1519, %v1575
  %v1584 = vadd.f32 %v1520, %v1576
  %v1585 = vadd.f32 %v1521, %v1577
  %v1586 = vadd.f32 %v1522, %v1578
  %v1587 = vadd.f32 %v1523, %v1579
  %v1588 = vld [vmem:[%s3] sm:$0x1]
  %v1590 = vlaneseq
  %v1591 = vshrl.u32 %v1590, 7
  %v1592 = vsub.s32 0, %v1591
  %v1593 = vrot.slane %v1588, %v1592
  %v1595 = vadd.f32 %v1580, %v1593
  %v1596 = vadd.f32 %v1581, %v1593
  %v1597 = vadd.f32 %v1582, %v1593
  %v1598 = vadd.f32 %v1583, %v1593
  %v1599 = vadd.f32 %v1584, %v1593
  %v1600 = vadd.f32 %v1585, %v1593
  %v1601 = vadd.f32 %v1586, %v1593
  %v1602 = vadd.f32 %v1587, %v1593
  %vm1603 = vcmp.ge.f32.partialorder %v1595, 0.0
  %vm1604 = vcmp.ge.f32.partialorder %v1596, 0.0
  %vm1605 = vcmp.ge.f32.partialorder %v1597, 0.0
  %vm1606 = vcmp.ge.f32.partialorder %v1598, 0.0
  %vm1607 = vcmp.ge.f32.partialorder %v1599, 0.0
  %vm1608 = vcmp.ge.f32.partialorder %v1600, 0.0
  %vm1609 = vcmp.ge.f32.partialorder %v1601, 0.0
  %vm1610 = vcmp.ge.f32.partialorder %v1602, 0.0
  %v1611 = vmul.f32 %v1595, 0.01
  %v1612 = vmul.f32 %v1596, 0.01
  %v1613 = vmul.f32 %v1597, 0.01
  %v1614 = vmul.f32 %v1598, 0.01
  %v1615 = vmul.f32 %v1599, 0.01
  %v1616 = vmul.f32 %v1600, 0.01
  %v1617 = vmul.f32 %v1601, 0.01
  %v1618 = vmul.f32 %v1602, 0.01
  %v1619 = vsel %vm1603, %v1595, %v1611
  %v1620 = vsel %vm1604, %v1596, %v1612
  %v1621 = vsel %vm1605, %v1597, %v1613
  %v1622 = vsel %vm1606, %v1598, %v1614
  %v1623 = vsel %vm1607, %v1599, %v1615
  %v1624 = vsel %vm1608, %v1600, %v1616
  %v1625 = vsel %vm1609, %v1601, %v1617
  %v1626 = vsel %vm1610, %v1602, %v1618
  %v1627 = vpack.c.bf16 %v1620, %v1619
  %v1628 = vpack.c.bf16 %v1622, %v1621
  %v1629 = vpack.c.bf16 %v1624, %v1623
  %v1630 = vpack.c.bf16 %v1626, %v1625
  %v1631 = vld [vmem:[%s4] sm:$0xff]
  %v1632 = vld [vmem:[%s4 + $0x8] sm:$0xff]
  %v1633 = vld [vmem:[%s4 + $0x10] sm:$0xff]
  %v1634 = vld [vmem:[%s4 + $0x18] sm:$0xff]
  %v1639 = vunpack.c.l.b16 %v1631
  %v1640 = vunpack.c.h.b16 %v1631
  %v1641 = vunpack.c.l.b16 %v1632
  %v1642 = vunpack.c.h.b16 %v1632
  %v1643 = vunpack.c.l.b16 %v1633
  %v1644 = vunpack.c.h.b16 %v1633
  %v1645 = vunpack.c.l.b16 %v1634
  %v1646 = vunpack.c.h.b16 %v1634
  %v1647 = vpack.c.b16 %v1641, %v1639
  %v1648 = vpack.c.b16 %v1642, %v1640
  %v1649 = vpack.c.b16 %v1645, %v1643
  %v1650 = vpack.c.b16 %v1646, %v1644
  %vm1655 = vcmask 261120
  %v1657 = vsel %vm1655, %v1627, 0
  %v1660 = vsel %vm1655, %v1628, 0
  %v1663 = vsel %vm1655, %v1629, 0
  %v1666 = vsel %vm1655, %v1630, 0
  %1668 = vmatprep.subr.bf16.mxu0 %v1648
  %1669 = vmatpush1.bf16.msra.mxu0 %v1647
  %1670 = vmatprep.subr.bf16.mxu0 %v1650
  %1671 = vmatpush1.bf16.msra.mxu0 %v1649
  %1672 = vmatprep.subr.bf16.mxu0 0
  %1673 = vmatpush1.bf16.msra.mxu0 0
  %1674 = vmatprep.subr.bf16.mxu0 0
  %1675 = vmatpush1.bf16.msra.mxu0 0
  %1676 = vmatprep.subr.bf16.mxu0 0
  %1677 = vmatpush1.bf16.msra.mxu0 0
  %1678 = vmatprep.subr.bf16.mxu0 0
  %1679 = vmatpush1.bf16.msra.mxu0 0
  %1680 = vmatprep.subr.bf16.mxu0 0
  %1681 = vmatpush1.bf16.msra.mxu0 0
  %1682 = vmatprep.subr.bf16.mxu0 0
  %1683 = vmatpush1.bf16.msra.mxu0 0
  %1684 = vmatprep.subr.bf16.mxu0 0
  %1685 = vmatpush1.bf16.msra.mxu0 0
  %1686 = vmatprep.subr.bf16.mxu0 0
  %1687 = vmatpush1.bf16.msra.mxu0 0
  %1688 = vmatprep.subr.bf16.mxu0 0
  %1689 = vmatpush1.bf16.msra.mxu0 0
  %1690 = vmatprep.subr.bf16.mxu0 0
  %1691 = vmatpush1.bf16.msra.mxu0 0
  %1692 = vmatprep.subr.bf16.mxu0 0
  %1693 = vmatpush1.bf16.msra.mxu0 0
  %1694 = vmatprep.subr.bf16.mxu0 0
  %1695 = vmatpush1.bf16.msra.mxu0 0
  %1696 = vmatprep.subr.bf16.mxu0 0
  %1697 = vmatpush1.bf16.msra.mxu0 0
  %1698 = vmatprep.subr.bf16.mxu0 0
  %1699 = vmatpush1.bf16.msra.mxu0 0
  %1700 = vmatprep.mubr.bf16.mxu0 0
  %1701 = vmatmul.mubr.bf16.gmra.mrb[0].mxu0 %v1657
  %v1702 = vpop.f32.mrb[0].mxu0
  %v1703 = vadd.f32 0.0, %v1702
  %v1704 = vpop.f32.mrb[0].mxu0
  %v1705 = vadd.f32 0.0, %v1704
  %v1706 = vpop.f32.mrb[0].mxu0
  %v1707 = vadd.f32 0.0, %v1706
  %v1708 = vpop.f32.mrb[0].mxu0
  %v1709 = vadd.f32 0.0, %v1708
  %1710 = vmatprep.mubr.bf16.mxu0 0
  %1711 = vmatmul.mubr.bf16.gmra.mrb[0].mxu0 %v1660
  %v1712 = vpop.f32.mrb[0].mxu0
  %v1713 = vadd.f32 0.0, %v1712
  %v1714 = vpop.f32.mrb[0].mxu0
  %v1715 = vadd.f32 0.0, %v1714
  %v1716 = vpop.f32.mrb[0].mxu0
  %v1717 = vadd.f32 0.0, %v1716
  %v1718 = vpop.f32.mrb[0].mxu0
  %v1719 = vadd.f32 0.0, %v1718
  %1720 = vmatprep.mubr.bf16.mxu0 0
  %1721 = vmatmul.mubr.bf16.gmra.mrb[0].mxu0 %v1663
  %v1722 = vpop.f32.mrb[0].mxu0
  %v1723 = vadd.f32 0.0, %v1722
  %v1724 = vpop.f32.mrb[0].mxu0
  %v1725 = vadd.f32 0.0, %v1724
  %v1726 = vpop.f32.mrb[0].mxu0
  %v1727 = vadd.f32 0.0, %v1726
  %v1728 = vpop.f32.mrb[0].mxu0
  %v1729 = vadd.f32 0.0, %v1728
  %1730 = vmatprep.mubr.bf16.mxu0 0
  %1731 = vmatmul.mubr.bf16.gmra.mrb[0].mxu0 %v1666
  %v1732 = vpop.f32.mrb[0].mxu0
  %v1733 = vadd.f32 0.0, %v1732
  %v1734 = vpop.f32.mrb[0].mxu0
  %v1735 = vadd.f32 0.0, %v1734
  %v1736 = vpop.f32.mrb[0].mxu0
  %v1737 = vadd.f32 0.0, %v1736
  %v1738 = vpop.f32.mrb[0].mxu0
  %v1739 = vadd.f32 0.0, %v1738
  %1740 = vdwg.mxu0
  %v1741 = vrot.slane %v1703, 7
  %v1742 = vrot.slane %v1707, 7
  %v1743 = vrot.slane %v1713, 7
  %v1744 = vrot.slane %v1717, 7
  %v1745 = vrot.slane %v1723, 7
  %v1746 = vrot.slane %v1727, 7
  %v1747 = vrot.slane %v1733, 7
  %v1748 = vrot.slane %v1737, 7
  %v1749 = vsel %vm898, %v1747, %v1748
  %v1750 = vsel %vm898, %v1746, %v1747
  %v1751 = vsel %vm898, %v1745, %v1746
  %v1752 = vsel %vm898, %v1744, %v1745
  %v1753 = vsel %vm898, %v1743, %v1744
  %v1754 = vsel %vm898, %v1742, %v1743
  %v1755 = vsel %vm898, %v1741, %v1742
  %v1756 = vsel %vm898, %v1748, %v1741
  %v1757 = vmul.f32 %v1749, %v910
  %v1758 = vmul.f32 %v1756, %v915
  %v1759 = vmul.f32 %v1755, %v920
  %v1760 = vmul.f32 %v1754, %v925
  %v1761 = vmul.f32 %v1753, %v930
  %v1762 = vmul.f32 %v1752, %v935
  %v1763 = vmul.f32 %v1751, %v940
  %v1764 = vmul.f32 %v1750, %v945
  %v1765 = vadd.f32 %v1757, 0.0
  %v1766 = vadd.f32 %v1758, 0.0
  %v1767 = vadd.f32 %v1759, 0.0
  %v1768 = vadd.f32 %v1760, 0.0
  %v1769 = vadd.f32 %v1761, 0.0
  %v1770 = vadd.f32 %v1762, 0.0
  %v1771 = vadd.f32 %v1763, 0.0
  %v1772 = vadd.f32 %v1764, 0.0
  %1781 = vrot.lane.b32.xlu0 %v1703, 112
  %v1782 = vpop.permute.xlu0 %1781
  %1783 = vrot.lane.b32.xlu0 %v1707, 112
  %v1784 = vpop.permute.xlu0 %1783
  %1785 = vrot.lane.b32.xlu0 %v1713, 112
  %v1786 = vpop.permute.xlu0 %1785
  %1787 = vrot.lane.b32.xlu0 %v1717, 112
  %v1788 = vpop.permute.xlu0 %1787
  %1789 = vrot.lane.b32.xlu0 %v1723, 112
  %v1790 = vpop.permute.xlu0 %1789
  %1791 = vrot.lane.b32.xlu0 %v1727, 112
  %v1792 = vpop.permute.xlu0 %1791
  %1793 = vrot.lane.b32.xlu0 %v1733, 112
  %v1794 = vpop.permute.xlu0 %1793
  %1795 = vrot.lane.b32.xlu0 %v1737, 112
  %v1796 = vpop.permute.xlu0 %1795
  %v1805 = vmul.f32 %v1796, %v997
  %v1806 = vmul.f32 %v1782, %v1001
  %v1807 = vmul.f32 %v1784, %v1005
  %v1808 = vmul.f32 %v1786, %v1009
  %v1809 = vmul.f32 %v1788, %v1013
  %v1810 = vmul.f32 %v1790, %v1017
  %v1811 = vmul.f32 %v1792, %v1021
  %v1812 = vmul.f32 %v1794, %v1025
  %v1813 = vadd.f32 %v1765, %v1805
  %v1814 = vadd.f32 %v1766, %v1806
  %v1815 = vadd.f32 %v1767, %v1807
  %v1816 = vadd.f32 %v1768, %v1808
  %v1817 = vadd.f32 %v1769, %v1809
  %v1818 = vadd.f32 %v1770, %v1810
  %v1819 = vadd.f32 %v1771, %v1811
  %v1820 = vadd.f32 %v1772, %v1812
  %1821 = vrot.lane.b32.xlu0 %v1703, 96
  %v1822 = vpop.permute.xlu0 %1821
  %1823 = vrot.lane.b32.xlu0 %v1707, 96
  %v1824 = vpop.permute.xlu0 %1823
  %1825 = vrot.lane.b32.xlu0 %v1713, 96
  %v1826 = vpop.permute.xlu0 %1825
  %1827 = vrot.lane.b32.xlu0 %v1717, 96
  %v1828 = vpop.permute.xlu0 %1827
  %1829 = vrot.lane.b32.xlu0 %v1723, 96
  %v1830 = vpop.permute.xlu0 %1829
  %1831 = vrot.lane.b32.xlu0 %v1727, 96
  %v1832 = vpop.permute.xlu0 %1831
  %1833 = vrot.lane.b32.xlu0 %v1733, 96
  %v1834 = vpop.permute.xlu0 %1833
  %1835 = vrot.lane.b32.xlu0 %v1737, 96
  %v1836 = vpop.permute.xlu0 %1835
  %v1845 = vrot.slane %v1822, 1
  %v1846 = vrot.slane %v1824, 1
  %v1847 = vrot.slane %v1826, 1
  %v1848 = vrot.slane %v1828, 1
  %v1849 = vrot.slane %v1830, 1
  %v1850 = vrot.slane %v1832, 1
  %v1851 = vrot.slane %v1834, 1
  %v1852 = vrot.slane %v1836, 1
  %v1853 = vsel %vm1075, %v1851, %v1852
  %v1854 = vsel %vm1075, %v1850, %v1851
  %v1855 = vsel %vm1075, %v1849, %v1850
  %v1856 = vsel %vm1075, %v1848, %v1849
  %v1857 = vsel %vm1075, %v1847, %v1848
  %v1858 = vsel %vm1075, %v1846, %v1847
  %v1859 = vsel %vm1075, %v1845, %v1846
  %v1860 = vsel %vm1075, %v1852, %v1845
  %v1861 = vmul.f32 %v1860, %v1086
  %v1862 = vmul.f32 %v1859, %v1090
  %v1863 = vmul.f32 %v1858, %v1094
  %v1864 = vmul.f32 %v1857, %v1098
  %v1865 = vmul.f32 %v1856, %v1102
  %v1866 = vmul.f32 %v1855, %v1106
  %v1867 = vmul.f32 %v1854, %v1110
  %v1868 = vmul.f32 %v1853, %v1114
  %v1869 = vadd.f32 %v1813, %v1861
  %v1870 = vadd.f32 %v1814, %v1862
  %v1871 = vadd.f32 %v1815, %v1863
  %v1872 = vadd.f32 %v1816, %v1864
  %v1873 = vadd.f32 %v1817, %v1865
  %v1874 = vadd.f32 %v1818, %v1866
  %v1875 = vadd.f32 %v1819, %v1867
  %v1876 = vadd.f32 %v1820, %v1868
  %1877 = vrot.lane.b32.xlu0 %v1703, 80
  %v1878 = vpop.permute.xlu0 %1877
  %1879 = vrot.lane.b32.xlu0 %v1707, 80
  %v1880 = vpop.permute.xlu0 %1879
  %1881 = vrot.lane.b32.xlu0 %v1713, 80
  %v1882 = vpop.permute.xlu0 %1881
  %1883 = vrot.lane.b32.xlu0 %v1717, 80
  %v1884 = vpop.permute.xlu0 %1883
  %1885 = vrot.lane.b32.xlu0 %v1723, 80
  %v1886 = vpop.permute.xlu0 %1885
  %1887 = vrot.lane.b32.xlu0 %v1727, 80
  %v1888 = vpop.permute.xlu0 %1887
  %1889 = vrot.lane.b32.xlu0 %v1733, 80
  %v1890 = vpop.permute.xlu0 %1889
  %1891 = vrot.lane.b32.xlu0 %v1737, 80
  %v1892 = vpop.permute.xlu0 %1891
  %v1901 = vrot.slane %v1878, 7
  %v1902 = vrot.slane %v1880, 7
  %v1903 = vrot.slane %v1882, 7
  %v1904 = vrot.slane %v1884, 7
  %v1905 = vrot.slane %v1886, 7
  %v1906 = vrot.slane %v1888, 7
  %v1907 = vrot.slane %v1890, 7
  %v1908 = vrot.slane %v1892, 7
  %v1909 = vsel %vm898, %v1907, %v1908
  %v1910 = vsel %vm898, %v1906, %v1907
  %v1911 = vsel %vm898, %v1905, %v1906
  %v1912 = vsel %vm898, %v1904, %v1905
  %v1913 = vsel %vm898, %v1903, %v1904
  %v1914 = vsel %vm898, %v1902, %v1903
  %v1915 = vsel %vm898, %v1901, %v1902
  %v1916 = vsel %vm898, %v1908, %v1901
  %v1917 = vmul.f32 %v1916, %v1174
  %v1918 = vmul.f32 %v1915, %v1178
  %v1919 = vmul.f32 %v1914, %v1182
  %v1920 = vmul.f32 %v1913, %v1186
  %v1921 = vmul.f32 %v1912, %v1190
  %v1922 = vmul.f32 %v1911, %v1194
  %v1923 = vmul.f32 %v1910, %v1198
  %v1924 = vmul.f32 %v1909, %v1202
  %v1925 = vadd.f32 %v1869, %v1917
  %v1926 = vadd.f32 %v1870, %v1918
  %v1927 = vadd.f32 %v1871, %v1919
  %v1928 = vadd.f32 %v1872, %v1920
  %v1929 = vadd.f32 %v1873, %v1921
  %v1930 = vadd.f32 %v1874, %v1922
  %v1931 = vadd.f32 %v1875, %v1923
  %v1932 = vadd.f32 %v1876, %v1924
  %v1933 = vmul.f32 %v1703, %v1222
  %v1934 = vmul.f32 %v1707, %v1226
  %v1935 = vmul.f32 %v1713, %v1230
  %v1936 = vmul.f32 %v1717, %v1234
  %v1937 = vmul.f32 %v1723, %v1238
  %v1938 = vmul.f32 %v1727, %v1242
  %v1939 = vmul.f32 %v1733, %v1246
  %v1940 = vmul.f32 %v1737, %v1250
  %1949 = vrot.lane.b32.xlu0 %v1933, 64
  %v1950 = vpop.permute.xlu0 %1949
  %1951 = vrot.lane.b32.xlu0 %v1934, 64
  %v1952 = vpop.permute.xlu0 %1951
  %1953 = vrot.lane.b32.xlu0 %v1935, 64
  %v1954 = vpop.permute.xlu0 %1953
  %1955 = vrot.lane.b32.xlu0 %v1936, 64
  %v1956 = vpop.permute.xlu0 %1955
  %1957 = vrot.lane.b32.xlu0 %v1937, 64
  %v1958 = vpop.permute.xlu0 %1957
  %1959 = vrot.lane.b32.xlu0 %v1938, 64
  %v1960 = vpop.permute.xlu0 %1959
  %1961 = vrot.lane.b32.xlu0 %v1939, 64
  %v1962 = vpop.permute.xlu0 %1961
  %1963 = vrot.lane.b32.xlu0 %v1940, 64
  %v1964 = vpop.permute.xlu0 %1963
  %v1973 = vadd.f32 %v1925, %v1950
  %v1974 = vadd.f32 %v1926, %v1952
  %v1975 = vadd.f32 %v1927, %v1954
  %v1976 = vadd.f32 %v1928, %v1956
  %v1977 = vadd.f32 %v1929, %v1958
  %v1978 = vadd.f32 %v1930, %v1960
  %v1979 = vadd.f32 %v1931, %v1962
  %v1980 = vadd.f32 %v1932, %v1964
  %1981 = vrot.lane.b32.xlu0 %v1703, 48
  %v1982 = vpop.permute.xlu0 %1981
  %1983 = vrot.lane.b32.xlu0 %v1707, 48
  %v1984 = vpop.permute.xlu0 %1983
  %1985 = vrot.lane.b32.xlu0 %v1713, 48
  %v1986 = vpop.permute.xlu0 %1985
  %1987 = vrot.lane.b32.xlu0 %v1717, 48
  %v1988 = vpop.permute.xlu0 %1987
  %1989 = vrot.lane.b32.xlu0 %v1723, 48
  %v1990 = vpop.permute.xlu0 %1989
  %1991 = vrot.lane.b32.xlu0 %v1727, 48
  %v1992 = vpop.permute.xlu0 %1991
  %1993 = vrot.lane.b32.xlu0 %v1733, 48
  %v1994 = vpop.permute.xlu0 %1993
  %1995 = vrot.lane.b32.xlu0 %v1737, 48
  %v1996 = vpop.permute.xlu0 %1995
  %v2005 = vrot.slane %v1982, 1
  %v2006 = vrot.slane %v1984, 1
  %v2007 = vrot.slane %v1986, 1
  %v2008 = vrot.slane %v1988, 1
  %v2009 = vrot.slane %v1990, 1
  %v2010 = vrot.slane %v1992, 1
  %v2011 = vrot.slane %v1994, 1
  %v2012 = vrot.slane %v1996, 1
  %v2013 = vsel %vm1075, %v2011, %v2012
  %v2014 = vsel %vm1075, %v2010, %v2011
  %v2015 = vsel %vm1075, %v2009, %v2010
  %v2016 = vsel %vm1075, %v2008, %v2009
  %v2017 = vsel %vm1075, %v2007, %v2008
  %v2018 = vsel %vm1075, %v2006, %v2007
  %v2019 = vsel %vm1075, %v2005, %v2006
  %v2020 = vsel %vm1075, %v2012, %v2005
  %v2021 = vmul.f32 %v2019, %v1318
  %v2022 = vmul.f32 %v2018, %v1322
  %v2023 = vmul.f32 %v2017, %v1326
  %v2024 = vmul.f32 %v2016, %v1330
  %v2025 = vmul.f32 %v2015, %v1334
  %v2026 = vmul.f32 %v2014, %v1338
  %v2027 = vmul.f32 %v2013, %v1342
  %v2028 = vmul.f32 %v2020, %v1346
  %v2029 = vadd.f32 %v1973, %v2021
  %v2030 = vadd.f32 %v1974, %v2022
  %v2031 = vadd.f32 %v1975, %v2023
  %v2032 = vadd.f32 %v1976, %v2024
  %v2033 = vadd.f32 %v1977, %v2025
  %v2034 = vadd.f32 %v1978, %v2026
  %v2035 = vadd.f32 %v1979, %v2027
  %v2036 = vadd.f32 %v1980, %v2028
  %2037 = vrot.lane.b32.xlu0 %v1703, 32
  %v2038 = vpop.permute.xlu0 %2037
  %2039 = vrot.lane.b32.xlu0 %v1707, 32
  %v2040 = vpop.permute.xlu0 %2039
  %2041 = vrot.lane.b32.xlu0 %v1713, 32
  %v2042 = vpop.permute.xlu0 %2041
  %2043 = vrot.lane.b32.xlu0 %v1717, 32
  %v2044 = vpop.permute.xlu0 %2043
  %2045 = vrot.lane.b32.xlu0 %v1723, 32
  %v2046 = vpop.permute.xlu0 %2045
  %2047 = vrot.lane.b32.xlu0 %v1727, 32
  %v2048 = vpop.permute.xlu0 %2047
  %2049 = vrot.lane.b32.xlu0 %v1733, 32
  %v2050 = vpop.permute.xlu0 %2049
  %2051 = vrot.lane.b32.xlu0 %v1737, 32
  %v2052 = vpop.permute.xlu0 %2051
  %v2061 = vrot.slane %v2038, 7
  %v2062 = vrot.slane %v2040, 7
  %v2063 = vrot.slane %v2042, 7
  %v2064 = vrot.slane %v2044, 7
  %v2065 = vrot.slane %v2046, 7
  %v2066 = vrot.slane %v2048, 7
  %v2067 = vrot.slane %v2050, 7
  %v2068 = vrot.slane %v2052, 7
  %v2069 = vsel %vm898, %v2067, %v2068
  %v2070 = vsel %vm898, %v2066, %v2067
  %v2071 = vsel %vm898, %v2065, %v2066
  %v2072 = vsel %vm898, %v2064, %v2065
  %v2073 = vsel %vm898, %v2063, %v2064
  %v2074 = vsel %vm898, %v2062, %v2063
  %v2075 = vsel %vm898, %v2061, %v2062
  %v2076 = vsel %vm898, %v2068, %v2061
  %v2077 = vmul.f32 %v2075, %v1406
  %v2078 = vmul.f32 %v2074, %v1410
  %v2079 = vmul.f32 %v2073, %v1414
  %v2080 = vmul.f32 %v2072, %v1418
  %v2081 = vmul.f32 %v2071, %v1422
  %v2082 = vmul.f32 %v2070, %v1426
  %v2083 = vmul.f32 %v2069, %v1430
  %v2084 = vmul.f32 %v2076, %v1434
  %v2085 = vadd.f32 %v2029, %v2077
  %v2086 = vadd.f32 %v2030, %v2078
  %v2087 = vadd.f32 %v2031, %v2079
  %v2088 = vadd.f32 %v2032, %v2080
  %v2089 = vadd.f32 %v2033, %v2081
  %v2090 = vadd.f32 %v2034, %v2082
  %v2091 = vadd.f32 %v2035, %v2083
  %v2092 = vadd.f32 %v2036, %v2084
  %2093 = vrot.lane.b32.xlu0 %v1703, 16
  %v2094 = vpop.permute.xlu0 %2093
  %2095 = vrot.lane.b32.xlu0 %v1707, 16
  %v2096 = vpop.permute.xlu0 %2095
  %2097 = vrot.lane.b32.xlu0 %v1713, 16
  %v2098 = vpop.permute.xlu0 %2097
  %2099 = vrot.lane.b32.xlu0 %v1717, 16
  %v2100 = vpop.permute.xlu0 %2099
  %2101 = vrot.lane.b32.xlu0 %v1723, 16
  %v2102 = vpop.permute.xlu0 %2101
  %2103 = vrot.lane.b32.xlu0 %v1727, 16
  %v2104 = vpop.permute.xlu0 %2103
  %2105 = vrot.lane.b32.xlu0 %v1733, 16
  %v2106 = vpop.permute.xlu0 %2105
  %2107 = vrot.lane.b32.xlu0 %v1737, 16
  %v2108 = vpop.permute.xlu0 %2107
  %v2117 = vmul.f32 %v2096, %v1478
  %v2118 = vmul.f32 %v2098, %v1482
  %v2119 = vmul.f32 %v2100, %v1486
  %v2120 = vmul.f32 %v2102, %v1490
  %v2121 = vmul.f32 %v2104, %v1494
  %v2122 = vmul.f32 %v2106, %v1498
  %v2123 = vmul.f32 %v2108, %v1502
  %v2124 = vmul.f32 %v2094, %v1506
  %v2125 = vadd.f32 %v2085, %v2117
  %v2126 = vadd.f32 %v2086, %v2118
  %v2127 = vadd.f32 %v2087, %v2119
  %v2128 = vadd.f32 %v2088, %v2120
  %v2129 = vadd.f32 %v2089, %v2121
  %v2130 = vadd.f32 %v2090, %v2122
  %v2131 = vadd.f32 %v2091, %v2123
  %v2132 = vadd.f32 %v2092, %v2124
  %v2133 = vrot.slane %v1705, 1
  %v2134 = vrot.slane %v1709, 1
  %v2135 = vrot.slane %v1715, 1
  %v2136 = vrot.slane %v1719, 1
  %v2137 = vrot.slane %v1725, 1
  %v2138 = vrot.slane %v1729, 1
  %v2139 = vrot.slane %v1735, 1
  %v2140 = vrot.slane %v1739, 1
  %v2141 = vsel %vm1075, %v2139, %v2140
  %v2142 = vsel %vm1075, %v2138, %v2139
  %v2143 = vsel %vm1075, %v2137, %v2138
  %v2144 = vsel %vm1075, %v2136, %v2137
  %v2145 = vsel %vm1075, %v2135, %v2136
  %v2146 = vsel %vm1075, %v2134, %v2135
  %v2147 = vsel %vm1075, %v2133, %v2134
  %v2148 = vsel %vm1075, %v2140, %v2133
  %v2149 = vmul.f32 %v2146, %v1542
  %v2150 = vmul.f32 %v2145, %v1546
  %v2151 = vmul.f32 %v2144, %v1550
  %v2152 = vmul.f32 %v2143, %v1554
  %v2153 = vmul.f32 %v2142, %v1558
  %v2154 = vmul.f32 %v2141, %v1562
  %v2155 = vmul.f32 %v2148, %v1566
  %v2156 = vmul.f32 %v2147, %v1570
  %v2157 = vadd.f32 %v2125, %v2149
  %v2158 = vadd.f32 %v2126, %v2150
  %v2159 = vadd.f32 %v2127, %v2151
  %v2160 = vadd.f32 %v2128, %v2152
  %v2161 = vadd.f32 %v2129, %v2153
  %v2162 = vadd.f32 %v2130, %v2154
  %v2163 = vadd.f32 %v2131, %v2155
  %v2164 = vadd.f32 %v2132, %v2156
  %v2165 = vld [vmem:[%s5] sm:$0x1]
  %v2167 = vlaneseq
  %v2168 = vshrl.u32 %v2167, 7
  %v2169 = vsub.s32 0, %v2168
  %v2170 = vrot.slane %v2165, %v2169
  %v2172 = vadd.f32 %v2157, %v2170
  %v2173 = vadd.f32 %v2158, %v2170
  %v2174 = vadd.f32 %v2159, %v2170
  %v2175 = vadd.f32 %v2160, %v2170
  %v2176 = vadd.f32 %v2161, %v2170
  %v2177 = vadd.f32 %v2162, %v2170
  %v2178 = vadd.f32 %v2163, %v2170
  %v2179 = vadd.f32 %v2164, %v2170
  %vm2180 = vcmp.ge.f32.partialorder %v2172, 0.0
  %vm2181 = vcmp.ge.f32.partialorder %v2173, 0.0
  %vm2182 = vcmp.ge.f32.partialorder %v2174, 0.0
  %vm2183 = vcmp.ge.f32.partialorder %v2175, 0.0
  %vm2184 = vcmp.ge.f32.partialorder %v2176, 0.0
  %vm2185 = vcmp.ge.f32.partialorder %v2177, 0.0
  %vm2186 = vcmp.ge.f32.partialorder %v2178, 0.0
  %vm2187 = vcmp.ge.f32.partialorder %v2179, 0.0
  %v2188 = vmul.f32 %v2172, 0.01
  %v2189 = vmul.f32 %v2173, 0.01
  %v2190 = vmul.f32 %v2174, 0.01
  %v2191 = vmul.f32 %v2175, 0.01
  %v2192 = vmul.f32 %v2176, 0.01
  %v2193 = vmul.f32 %v2177, 0.01
  %v2194 = vmul.f32 %v2178, 0.01
  %v2195 = vmul.f32 %v2179, 0.01
  %v2196 = vsel %vm2180, %v2172, %v2188
  %v2197 = vsel %vm2181, %v2173, %v2189
  %v2198 = vsel %vm2182, %v2174, %v2190
  %v2199 = vsel %vm2183, %v2175, %v2191
  %v2200 = vsel %vm2184, %v2176, %v2192
  %v2201 = vsel %vm2185, %v2177, %v2193
  %v2202 = vsel %vm2186, %v2178, %v2194
  %v2203 = vsel %vm2187, %v2179, %v2195
  %v2204 = vld [vmem:[%s8] sm:$0xff]
  %v2205 = vld [vmem:[%s8 + $0x8] sm:$0xff]
  %v2206 = vld [vmem:[%s8 + $0x10] sm:$0xff]
  %v2207 = vld [vmem:[%s8 + $0x18] sm:$0xff]
  %v2208 = vld [vmem:[%s8 + $0x20] sm:$0xff]
  %v2209 = vld [vmem:[%s8 + $0x28] sm:$0xff]
  %v2210 = vld [vmem:[%s8 + $0x30] sm:$0xff]
  %v2211 = vld [vmem:[%s8 + $0x38] sm:$0xff]
  %2213 = vset.pattern.permute.xlu0 0
  %2214 = vperm.xlu0 %2213, %v2204
  %v2215 = vpop.permute.xlu0 %2214
  %2218 = vset.pattern.permute.xlu0 0
  %2219 = vperm.xlu0 %2218, %v2205
  %v2220 = vpop.permute.xlu0 %2219
  %2223 = vset.pattern.permute.xlu0 0
  %2224 = vperm.xlu0 %2223, %v2206
  %v2225 = vpop.permute.xlu0 %2224
  %2228 = vset.pattern.permute.xlu0 0
  %2229 = vperm.xlu0 %2228, %v2207
  %v2230 = vpop.permute.xlu0 %2229
  %2233 = vset.pattern.permute.xlu0 0
  %2234 = vperm.xlu0 %2233, %v2208
  %v2235 = vpop.permute.xlu0 %2234
  %2238 = vset.pattern.permute.xlu0 0
  %2239 = vperm.xlu0 %2238, %v2209
  %v2240 = vpop.permute.xlu0 %2239
  %2243 = vset.pattern.permute.xlu0 0
  %2244 = vperm.xlu0 %2243, %v2210
  %v2245 = vpop.permute.xlu0 %2244
  %2248 = vset.pattern.permute.xlu0 0
  %2249 = vperm.xlu0 %2248, %v2211
  %v2250 = vpop.permute.xlu0 %2249
  %v2252 = vmul.f32 %v2196, %v2215
  %v2253 = vmul.f32 %v2197, %v2220
  %v2254 = vmul.f32 %v2198, %v2225
  %v2255 = vmul.f32 %v2199, %v2230
  %v2256 = vmul.f32 %v2200, %v2235
  %v2257 = vmul.f32 %v2201, %v2240
  %v2258 = vmul.f32 %v2202, %v2245
  %v2259 = vmul.f32 %v2203, %v2250
  %vm2260 = vcmp.ge.f32.partialorder %v2252, 0.0
  %vm2261 = vcmp.ge.f32.partialorder %v2253, 0.0
  %vm2262 = vcmp.ge.f32.partialorder %v2254, 0.0
  %vm2263 = vcmp.ge.f32.partialorder %v2255, 0.0
  %vm2264 = vcmp.ge.f32.partialorder %v2256, 0.0
  %vm2265 = vcmp.ge.f32.partialorder %v2257, 0.0
  %vm2266 = vcmp.ge.f32.partialorder %v2258, 0.0
  %vm2267 = vcmp.ge.f32.partialorder %v2259, 0.0
  %v2268 = vmul.f32 %v2252, 0.01
  %v2269 = vmul.f32 %v2253, 0.01
  %v2270 = vmul.f32 %v2254, 0.01
  %v2271 = vmul.f32 %v2255, 0.01
  %v2272 = vmul.f32 %v2256, 0.01
  %v2273 = vmul.f32 %v2257, 0.01
  %v2274 = vmul.f32 %v2258, 0.01
  %v2275 = vmul.f32 %v2259, 0.01
  %v2276 = vsel %vm2260, %v2252, %v2268
  %v2277 = vsel %vm2261, %v2253, %v2269
  %v2278 = vsel %vm2262, %v2254, %v2270
  %v2279 = vsel %vm2263, %v2255, %v2271
  %v2280 = vsel %vm2264, %v2256, %v2272
  %v2281 = vsel %vm2265, %v2257, %v2273
  %v2282 = vsel %vm2266, %v2258, %v2274
  %v2283 = vsel %vm2267, %v2259, %v2275
  %v2284 = vrot.slane %v2276, 7
  %v2285 = vrot.slane %v2277, 7
  %v2286 = vrot.slane %v2278, 7
  %v2287 = vrot.slane %v2279, 7
  %v2288 = vrot.slane %v2280, 7
  %v2289 = vrot.slane %v2281, 7
  %v2290 = vrot.slane %v2282, 7
  %v2291 = vrot.slane %v2283, 7
  %v2292 = vsel %vm898, %v2290, %v2291
  %v2293 = vsel %vm898, %v2289, %v2290
  %v2294 = vsel %vm898, %v2288, %v2289
  %v2295 = vsel %vm898, %v2287, %v2288
  %v2296 = vsel %vm898, %v2286, %v2287
  %v2297 = vsel %vm898, %v2285, %v2286
  %v2298 = vsel %vm898, %v2284, %v2285
  %v2299 = vsel %vm898, %v2291, %v2284
  %v2300 = vmul.f32 %v2292, %v910
  %v2301 = vmul.f32 %v2299, %v915
  %v2302 = vmul.f32 %v2298, %v920
  %v2303 = vmul.f32 %v2297, %v925
  %v2304 = vmul.f32 %v2296, %v930
  %v2305 = vmul.f32 %v2295, %v935
  %v2306 = vmul.f32 %v2294, %v940
  %v2307 = vmul.f32 %v2293, %v945
  %v2309 = vlaneseq
  %v2310 = vshrl.u32 %v2309, 7
  %v2311 = vsub.s32 0, %v2310
  %v2312 = vrot.slane %v43, %v2311
  %v2314 = vmul.f32 %v2300, %v2312
  %v2315 = vmul.f32 %v2301, %v2312
  %v2316 = vmul.f32 %v2302, %v2312
  %v2317 = vmul.f32 %v2303, %v2312
  %v2318 = vmul.f32 %v2304, %v2312
  %v2319 = vmul.f32 %v2305, %v2312
  %v2320 = vmul.f32 %v2306, %v2312
  %v2321 = vmul.f32 %v2307, %v2312
  %v2322 = vadd.f32 %v2314, 0.0
  %v2323 = vadd.f32 %v2315, 0.0
  %v2324 = vadd.f32 %v2316, 0.0
  %v2325 = vadd.f32 %v2317, 0.0
  %v2326 = vadd.f32 %v2318, 0.0
  %v2327 = vadd.f32 %v2319, 0.0
  %v2328 = vadd.f32 %v2320, 0.0
  %v2329 = vadd.f32 %v2321, 0.0
  %v2330 = vmul.f32 %v2283, %v997
  %v2331 = vmul.f32 %v2276, %v1001
  %v2332 = vmul.f32 %v2277, %v1005
  %v2333 = vmul.f32 %v2278, %v1009
  %v2334 = vmul.f32 %v2279, %v1013
  %v2335 = vmul.f32 %v2280, %v1017
  %v2336 = vmul.f32 %v2281, %v1021
  %v2337 = vmul.f32 %v2282, %v1025
  %v2339 = vlaneseq
  %v2340 = vshrl.u32 %v2339, 7
  %v2341 = vsub.s32 0, %v2340
  %v2342 = vrot.slane %v44, %v2341
  %v2344 = vmul.f32 %v2330, %v2342
  %v2345 = vmul.f32 %v2331, %v2342
  %v2346 = vmul.f32 %v2332, %v2342
  %v2347 = vmul.f32 %v2333, %v2342
  %v2348 = vmul.f32 %v2334, %v2342
  %v2349 = vmul.f32 %v2335, %v2342
  %v2350 = vmul.f32 %v2336, %v2342
  %v2351 = vmul.f32 %v2337, %v2342
  %v2352 = vadd.f32 %v2322, %v2344
  %v2353 = vadd.f32 %v2323, %v2345
  %v2354 = vadd.f32 %v2324, %v2346
  %v2355 = vadd.f32 %v2325, %v2347
  %v2356 = vadd.f32 %v2326, %v2348
  %v2357 = vadd.f32 %v2327, %v2349
  %v2358 = vadd.f32 %v2328, %v2350
  %v2359 = vadd.f32 %v2329, %v2351
  %v2360 = vrot.slane %v2276, 1
  %v2361 = vrot.slane %v2277, 1
  %v2362 = vrot.slane %v2278, 1
  %v2363 = vrot.slane %v2279, 1
  %v2364 = vrot.slane %v2280, 1
  %v2365 = vrot.slane %v2281, 1
  %v2366 = vrot.slane %v2282, 1
  %v2367 = vrot.slane %v2283, 1
  %v2368 = vsel %vm1075, %v2366, %v2367
  %v2369 = vsel %vm1075, %v2365, %v2366
  %v2370 = vsel %vm1075, %v2364, %v2365
  %v2371 = vsel %vm1075, %v2363, %v2364
  %v2372 = vsel %vm1075, %v2362, %v2363
  %v2373 = vsel %vm1075, %v2361, %v2362
  %v2374 = vsel %vm1075, %v2360, %v2361
  %v2375 = vsel %vm1075, %v2367, %v2360
  %v2376 = vmul.f32 %v2375, %v1086
  %v2377 = vmul.f32 %v2374, %v1090
  %v2378 = vmul.f32 %v2373, %v1094
  %v2379 = vmul.f32 %v2372, %v1098
  %v2380 = vmul.f32 %v2371, %v1102
  %v2381 = vmul.f32 %v2370, %v1106
  %v2382 = vmul.f32 %v2369, %v1110
  %v2383 = vmul.f32 %v2368, %v1114
  %v2385 = vlaneseq
  %v2386 = vshrl.u32 %v2385, 7
  %v2387 = vsub.s32 0, %v2386
  %v2388 = vrot.slane %v45, %v2387
  %v2390 = vmul.f32 %v2376, %v2388
  %v2391 = vmul.f32 %v2377, %v2388
  %v2392 = vmul.f32 %v2378, %v2388
  %v2393 = vmul.f32 %v2379, %v2388
  %v2394 = vmul.f32 %v2380, %v2388
  %v2395 = vmul.f32 %v2381, %v2388
  %v2396 = vmul.f32 %v2382, %v2388
  %v2397 = vmul.f32 %v2383, %v2388
  %v2398 = vadd.f32 %v2352, %v2390
  %v2399 = vadd.f32 %v2353, %v2391
  %v2400 = vadd.f32 %v2354, %v2392
  %v2401 = vadd.f32 %v2355, %v2393
  %v2402 = vadd.f32 %v2356, %v2394
  %v2403 = vadd.f32 %v2357, %v2395
  %v2404 = vadd.f32 %v2358, %v2396
  %v2405 = vadd.f32 %v2359, %v2397
  %v2406 = vmul.f32 %v2299, %v1174
  %v2407 = vmul.f32 %v2298, %v1178
  %v2408 = vmul.f32 %v2297, %v1182
  %v2409 = vmul.f32 %v2296, %v1186
  %v2410 = vmul.f32 %v2295, %v1190
  %v2411 = vmul.f32 %v2294, %v1194
  %v2412 = vmul.f32 %v2293, %v1198
  %v2413 = vmul.f32 %v2292, %v1202
  %v2415 = vlaneseq
  %v2416 = vshrl.u32 %v2415, 7
  %v2417 = vsub.s32 0, %v2416
  %v2418 = vrot.slane %v46, %v2417
  %v2420 = vmul.f32 %v2406, %v2418
  %v2421 = vmul.f32 %v2407, %v2418
  %v2422 = vmul.f32 %v2408, %v2418
  %v2423 = vmul.f32 %v2409, %v2418
  %v2424 = vmul.f32 %v2410, %v2418
  %v2425 = vmul.f32 %v2411, %v2418
  %v2426 = vmul.f32 %v2412, %v2418
  %v2427 = vmul.f32 %v2413, %v2418
  %v2428 = vadd.f32 %v2398, %v2420
  %v2429 = vadd.f32 %v2399, %v2421
  %v2430 = vadd.f32 %v2400, %v2422
  %v2431 = vadd.f32 %v2401, %v2423
  %v2432 = vadd.f32 %v2402, %v2424
  %v2433 = vadd.f32 %v2403, %v2425
  %v2434 = vadd.f32 %v2404, %v2426
  %v2435 = vadd.f32 %v2405, %v2427
  %v2436 = vmul.f32 %v2276, %v1222
  %v2437 = vmul.f32 %v2277, %v1226
  %v2438 = vmul.f32 %v2278, %v1230
  %v2439 = vmul.f32 %v2279, %v1234
  %v2440 = vmul.f32 %v2280, %v1238
  %v2441 = vmul.f32 %v2281, %v1242
  %v2442 = vmul.f32 %v2282, %v1246
  %v2443 = vmul.f32 %v2283, %v1250
  %v2445 = vlaneseq
  %v2446 = vshrl.u32 %v2445, 7
  %v2447 = vsub.s32 0, %v2446
  %v2448 = vrot.slane %v47, %v2447
  %v2450 = vmul.f32 %v2436, %v2448
  %v2451 = vmul.f32 %v2437, %v2448
  %v2452 = vmul.f32 %v2438, %v2448
  %v2453 = vmul.f32 %v2439, %v2448
  %v2454 = vmul.f32 %v2440, %v2448
  %v2455 = vmul.f32 %v2441, %v2448
  %v2456 = vmul.f32 %v2442, %v2448
  %v2457 = vmul.f32 %v2443, %v2448
  %v2458 = vadd.f32 %v2428, %v2450
  %v2459 = vadd.f32 %v2429, %v2451
  %v2460 = vadd.f32 %v2430, %v2452
  %v2461 = vadd.f32 %v2431, %v2453
  %v2462 = vadd.f32 %v2432, %v2454
  %v2463 = vadd.f32 %v2433, %v2455
  %v2464 = vadd.f32 %v2434, %v2456
  %v2465 = vadd.f32 %v2435, %v2457
  %v2466 = vmul.f32 %v2374, %v1318
  %v2467 = vmul.f32 %v2373, %v1322
  %v2468 = vmul.f32 %v2372, %v1326
  %v2469 = vmul.f32 %v2371, %v1330
  %v2470 = vmul.f32 %v2370, %v1334
  %v2471 = vmul.f32 %v2369, %v1338
  %v2472 = vmul.f32 %v2368, %v1342
  %v2473 = vmul.f32 %v2375, %v1346
  %v2475 = vlaneseq
  %v2476 = vshrl.u32 %v2475, 7
  %v2477 = vsub.s32 0, %v2476
  %v2478 = vrot.slane %v48, %v2477
  %v2480 = vmul.f32 %v2466, %v2478
  %v2481 = vmul.f32 %v2467, %v2478
  %v2482 = vmul.f32 %v2468, %v2478
  %v2483 = vmul.f32 %v2469, %v2478
  %v2484 = vmul.f32 %v2470, %v2478
  %v2485 = vmul.f32 %v2471, %v2478
  %v2486 = vmul.f32 %v2472, %v2478
  %v2487 = vmul.f32 %v2473, %v2478
  %v2488 = vadd.f32 %v2458, %v2480
  %v2489 = vadd.f32 %v2459, %v2481
  %v2490 = vadd.f32 %v2460, %v2482
  %v2491 = vadd.f32 %v2461, %v2483
  %v2492 = vadd.f32 %v2462, %v2484
  %v2493 = vadd.f32 %v2463, %v2485
  %v2494 = vadd.f32 %v2464, %v2486
  %v2495 = vadd.f32 %v2465, %v2487
  %v2496 = vmul.f32 %v2298, %v1406
  %v2497 = vmul.f32 %v2297, %v1410
  %v2498 = vmul.f32 %v2296, %v1414
  %v2499 = vmul.f32 %v2295, %v1418
  %v2500 = vmul.f32 %v2294, %v1422
  %v2501 = vmul.f32 %v2293, %v1426
  %v2502 = vmul.f32 %v2292, %v1430
  %v2503 = vmul.f32 %v2299, %v1434
  %v2505 = vlaneseq
  %v2506 = vshrl.u32 %v2505, 7
  %v2507 = vsub.s32 0, %v2506
  %v2508 = vrot.slane %v49, %v2507
  %v2510 = vmul.f32 %v2496, %v2508
  %v2511 = vmul.f32 %v2497, %v2508
  %v2512 = vmul.f32 %v2498, %v2508
  %v2513 = vmul.f32 %v2499, %v2508
  %v2514 = vmul.f32 %v2500, %v2508
  %v2515 = vmul.f32 %v2501, %v2508
  %v2516 = vmul.f32 %v2502, %v2508
  %v2517 = vmul.f32 %v2503, %v2508
  %v2518 = vadd.f32 %v2488, %v2510
  %v2519 = vadd.f32 %v2489, %v2511
  %v2520 = vadd.f32 %v2490, %v2512
  %v2521 = vadd.f32 %v2491, %v2513
  %v2522 = vadd.f32 %v2492, %v2514
  %v2523 = vadd.f32 %v2493, %v2515
  %v2524 = vadd.f32 %v2494, %v2516
  %v2525 = vadd.f32 %v2495, %v2517
  %v2526 = vmul.f32 %v2277, %v1478
  %v2527 = vmul.f32 %v2278, %v1482
  %v2528 = vmul.f32 %v2279, %v1486
  %v2529 = vmul.f32 %v2280, %v1490
  %v2530 = vmul.f32 %v2281, %v1494
  %v2531 = vmul.f32 %v2282, %v1498
  %v2532 = vmul.f32 %v2283, %v1502
  %v2533 = vmul.f32 %v2276, %v1506
  %v2535 = vlaneseq
  %v2536 = vshrl.u32 %v2535, 7
  %v2537 = vsub.s32 0, %v2536
  %v2538 = vrot.slane %v50, %v2537
  %v2540 = vmul.f32 %v2526, %v2538
  %v2541 = vmul.f32 %v2527, %v2538
  %v2542 = vmul.f32 %v2528, %v2538
  %v2543 = vmul.f32 %v2529, %v2538
  %v2544 = vmul.f32 %v2530, %v2538
  %v2545 = vmul.f32 %v2531, %v2538
  %v2546 = vmul.f32 %v2532, %v2538
  %v2547 = vmul.f32 %v2533, %v2538
  %v2548 = vadd.f32 %v2518, %v2540
  %v2549 = vadd.f32 %v2519, %v2541
  %v2550 = vadd.f32 %v2520, %v2542
  %v2551 = vadd.f32 %v2521, %v2543
  %v2552 = vadd.f32 %v2522, %v2544
  %v2553 = vadd.f32 %v2523, %v2545
  %v2554 = vadd.f32 %v2524, %v2546
  %v2555 = vadd.f32 %v2525, %v2547
  %v2556 = vmul.f32 %v2373, %v1542
  %v2557 = vmul.f32 %v2372, %v1546
  %v2558 = vmul.f32 %v2371, %v1550
  %v2559 = vmul.f32 %v2370, %v1554
  %v2560 = vmul.f32 %v2369, %v1558
  %v2561 = vmul.f32 %v2368, %v1562
  %v2562 = vmul.f32 %v2375, %v1566
  %v2563 = vmul.f32 %v2374, %v1570
  %v2565 = vlaneseq
  %v2566 = vshrl.u32 %v2565, 7
  %v2567 = vsub.s32 0, %v2566
  %v2568 = vrot.slane %v51, %v2567
  %v2570 = vmul.f32 %v2556, %v2568
  %v2571 = vmul.f32 %v2557, %v2568
  %v2572 = vmul.f32 %v2558, %v2568
  %v2573 = vmul.f32 %v2559, %v2568
  %v2574 = vmul.f32 %v2560, %v2568
  %v2575 = vmul.f32 %v2561, %v2568
  %v2576 = vmul.f32 %v2562, %v2568
  %v2577 = vmul.f32 %v2563, %v2568
  %v2578 = vadd.f32 %v2548, %v2570
  %v2579 = vadd.f32 %v2549, %v2571
  %v2580 = vadd.f32 %v2550, %v2572
  %v2581 = vadd.f32 %v2551, %v2573
  %v2582 = vadd.f32 %v2552, %v2574
  %v2583 = vadd.f32 %v2553, %v2575
  %v2584 = vadd.f32 %v2554, %v2576
  %v2585 = vadd.f32 %v2555, %v2577
  %vm2586 = vcmask 130048
  %v2587 = vsel %vm2586, %v2578, 0.0
  %2588 = vadd.xlane.f32.xlu0 %v2587
  %v2589 = vpop.xlane.xlu0 %2588
  %v2590 = vsel %vm2586, %v2579, 0.0
  %2591 = vadd.xlane.f32.xlu0 %v2590
  %v2592 = vpop.xlane.xlu0 %2591
  %v2593 = vsel %vm2586, %v2580, 0.0
  %2594 = vadd.xlane.f32.xlu0 %v2593
  %v2595 = vpop.xlane.xlu0 %2594
  %v2596 = vsel %vm2586, %v2581, 0.0
  %2597 = vadd.xlane.f32.xlu0 %v2596
  %v2598 = vpop.xlane.xlu0 %2597
  %v2599 = vsel %vm2586, %v2582, 0.0
  %2600 = vadd.xlane.f32.xlu0 %v2599
  %v2601 = vpop.xlane.xlu0 %2600
  %v2602 = vsel %vm2586, %v2583, 0.0
  %2603 = vadd.xlane.f32.xlu0 %v2602
  %v2604 = vpop.xlane.xlu0 %2603
  %v2605 = vsel %vm2586, %v2584, 0.0
  %2606 = vadd.xlane.f32.xlu0 %v2605
  %v2607 = vpop.xlane.xlu0 %2606
  %v2608 = vsel %vm2586, %v2585, 0.0
  %2609 = vadd.xlane.f32.xlu0 %v2608
  %v2610 = vpop.xlane.xlu0 %2609
  %v2611 = vld [vmem:[#allocation2] sm:$0x1]
  %v2613 = vlaneseq
  %v2614 = vshrl.u32 %v2613, 7
  %v2615 = vsub.s32 0, %v2614
  %v2616 = vrot.slane %v2611, %v2615
  %v2618 = vadd.f32 %v2589, %v2616
  %v2619 = vadd.f32 %v2592, %v2616
  %v2620 = vadd.f32 %v2595, %v2616
  %v2621 = vadd.f32 %v2598, %v2616
  %v2622 = vadd.f32 %v2601, %v2616
  %v2623 = vadd.f32 %v2604, %v2616
  %v2624 = vadd.f32 %v2607, %v2616
  %v2625 = vadd.f32 %v2610, %v2616
  %v2626 = vsub.f32 0.0, %v2618
  %v2627 = vsub.f32 0.0, %v2619
  %v2628 = vsub.f32 0.0, %v2620
  %v2629 = vsub.f32 0.0, %v2621
  %v2630 = vsub.f32 0.0, %v2622
  %v2631 = vsub.f32 0.0, %v2623
  %v2632 = vsub.f32 0.0, %v2624
  %v2633 = vsub.f32 0.0, %v2625
  %v2634 = vmul.f32 %v2626, 1.442695
  %v2635 = vpow.pop %v2634
  %v2636 = vmul.f32 %v2627, 1.442695
  %v2637 = vpow.pop %v2636
  %v2638 = vmul.f32 %v2628, 1.442695
  %v2639 = vpow.pop %v2638
  %v2640 = vmul.f32 %v2629, 1.442695
  %v2641 = vpow.pop %v2640
  %v2642 = vmul.f32 %v2630, 1.442695
  %v2643 = vpow.pop %v2642
  %v2644 = vmul.f32 %v2631, 1.442695
  %v2645 = vpow.pop %v2644
  %v2646 = vmul.f32 %v2632, 1.442695
  %v2647 = vpow.pop %v2646
  %v2648 = vmul.f32 %v2633, 1.442695
  %v2649 = vpow.pop %v2648
  %v2650 = vadd.f32 %v2635, 1.0
  %v2651 = vadd.f32 %v2637, 1.0
  %v2652 = vadd.f32 %v2639, 1.0
  %v2653 = vadd.f32 %v2641, 1.0
  %v2654 = vadd.f32 %v2643, 1.0
  %v2655 = vadd.f32 %v2645, 1.0
  %v2656 = vadd.f32 %v2647, 1.0
  %v2657 = vadd.f32 %v2649, 1.0
  %v2658 = vrcp.pop %v2650
  %v2659 = vmul.f32 1.0, %v2658
  %v2660 = vrcp.pop %v2651
  %v2661 = vmul.f32 1.0, %v2660
  %v2662 = vrcp.pop %v2652
  %v2663 = vmul.f32 1.0, %v2662
  %v2664 = vrcp.pop %v2653
  %v2665 = vmul.f32 1.0, %v2664
  %v2666 = vrcp.pop %v2654
  %v2667 = vmul.f32 1.0, %v2666
  %v2668 = vrcp.pop %v2655
  %v2669 = vmul.f32 1.0, %v2668
  %v2670 = vrcp.pop %v2656
  %v2671 = vmul.f32 1.0, %v2670
  %v2672 = vrcp.pop %v2657
  %v2673 = vmul.f32 1.0, %v2672
  %vm2674 = vcmask 7168
  %2675 = vst.msk [vmem:[%s9] sm:$0xff] %vm2674, %v2659
  %2676 = vst.msk [vmem:[%s9 + $0x8] sm:$0xff] %vm2674, %v2661
  %2677 = vst.msk [vmem:[%s9 + $0x10] sm:$0xff] %vm2674, %v2663
  %2678 = vst.msk [vmem:[%s9 + $0x18] sm:$0xff] %vm2674, %v2665
  %2679 = vst.msk [vmem:[%s9 + $0x20] sm:$0xff] %vm2674, %v2667
  %2680 = vst.msk [vmem:[%s9 + $0x28] sm:$0xff] %vm2674, %v2669
  %2681 = vst.msk [vmem:[%s9 + $0x30] sm:$0xff] %vm2674, %v2671
  %2682 = vst.msk [vmem:[%s9 + $0x38] sm:$0xff] %vm2674, %v2673
  // Predicated region
  $region38: #{chunk_enhancer_forward.1} parent=0 // pred_check
    _
  $region39: #{chunk_enhancer_forward.1} parent=0 // pred_check_branch
    %2684 = sbr.rel (0) target = $region41
  $region40: #{chunk_enhancer_forward.1} parent=0 // pred_region
    _
  $region41: #{chunk_enhancer_forward.1} parent=0 // pred_fallthru
    _
  // Predicated region
  $region42: #{chunk_enhancer_forward.1} parent=0 // pred_check
    _
  $region43: #{chunk_enhancer_forward.1} parent=0 // pred_check_branch
    %2686 = sbr.rel (0) target = $region45
  $region44: #{chunk_enhancer_forward.1} parent=0 // pred_region
    _
  $region45: #{chunk_enhancer_forward.1} parent=0 // pred_fallthru
    _

</llo_original>
